<compile_context>
chip_gen: v5e
topology: v5e:2x2
jax: 0.10.0
libtpu: 0.0.40
codegen_flags: <defaults>
</compile_context>

<pallas_src>
import functools

import jax
import jax.numpy as jnp
from jax.experimental import pallas as pl
from jax.experimental.pallas import tpu as pltpu


# ----------------------------- group helpers (glue) -----------------------------

def groupsize(g):
    return 2 ** max(sum(g), 0)


def subgroupsize(g, i):
    return 2 ** max(g[i], 0)


def build_filter(weight, bias, group):
    """JAX port of GroupConv2d.build_filter for rotation-only groups (group[0]==0).

    weight: (O, I, G, K, K) -> filter (O*G, I*G, K, K), bias (O*G,)
    """
    G = groupsize(group)
    n_rot = subgroupsize(group, 1)
    assert group[0] == 0 and n_rot == G, "only pure 90-degree rotation groups implemented"
    # TODO(synk): flip groups (group[0]==1 -> transform_pnm) and arbitrary-angle
    # rotations (torchvision rotate path of rotate_n) are not implemented.
    mats = []
    for r in range(n_rot):
        rot = jnp.rot90(weight, k=r, axes=(-2, -1))   # rotate_n: r * 90deg spatial rot
        rot = jnp.roll(rot, r, axis=-3)               # rotatestack_n: permute group axis
        mats.append(rot)
    filt = jnp.stack(mats, axis=1)                    # (O, G, I, G, K, K)  == stack dim=-5
    O, _, I, _, K, _ = filt.shape
    filt = filt.reshape(O * G, I * G, K, K)           # OIHW replicated filter
    bias_full = jnp.repeat(bias, G)                   # stack along dim=1 then flatten
    return filt, bias_full


def _pick_row_band(Hout, Wout, target_rows=512):
    """Smallest divisor TH of Hout with TH*Wout >= target_rows and 8-aligned rows."""
    divisors = [d for d in range(1, Hout + 1) if Hout % d == 0]
    for d in divisors:
        if d * Wout >= target_rows and (d * Wout) % 8 == 0:
            return d
    for d in reversed(divisors):
        if (d * Wout) % 8 == 0:
            return d
    return Hout   # full-extent fallback keeps the out BlockSpec legal even if M%8 != 0


# --------------------------------- Pallas kernel ---------------------------------

def _group_conv2d_kernel(x_ref, w_ref, b_ref, o_ref, *, K, TH, Wout):
    # x_ref: (1, Hp, Wp, Cin)        bf16 full padded NHWC plane for one batch elem
    #                                 (index_map ignores the band axis -> resident per b)
    # w_ref: (K*K*Cin, Cout)         bf16 folded im2col weights (grid-invariant)
    # b_ref: (1, Cout)               f32 bias (grid-invariant)
    # o_ref: (1, TH*Wout, Cout)      output slab for one row band (Cout = real channels)
    h0 = pl.multiple_of(pl.program_id(1) * TH, TH)    # first output row of this band
    M = TH * Wout

    # Folded im2col: one lane-axis concat per band (XLU / load-slot work that overlaps
    # the MXU), then a single matmul with contraction K*K*Cin instead of 9 tiny ones.
    # The (TH, Wout, Cin) -> (M, Cin) merge folds leading dims into the sublane axis
    # (no lane relayout); verified against pl.lower_as_mlir on the f32 variant.
    slabs = []
    for kh in range(K):               # short fixed 3x3 tap loop, unrolled at trace time
        for kw in range(K):
            xs = x_ref[0, pl.ds(h0 + kh, TH), pl.ds(kw, Wout), :]   # (TH, Wout, Cin)
            slabs.append(xs.reshape(M, xs.shape[-1]))               # (M, Cin)
    lhs = jnp.concatenate(slabs, axis=-1)                           # (M, K*K*Cin) bf16

    # Single MXU matmul, f32 accumulation in vregs (no VMEM scratch accumulator).
    acc = jnp.dot(lhs, w_ref[...], preferred_element_type=jnp.float32)   # (M, Cout) f32

    # f32 epilogue (bias add), single store of only the real Cout lanes.
    o_ref[0, :, :] = (acc + b_ref[...]).astype(o_ref.dtype)


def group_conv2d_forward(x, weight, bias, group, padding):
    """Forward pass of GroupConv2d.

    x:      (B, in_channels, G, H, W)  (viewed as (B, in_channels*G, H, W) like torch)
    weight: (out_channels, in_channels, G, K, K)
    bias:   (out_channels,)
    returns (B, out_channels, G, Hout, Wout)
    """
    G = groupsize(group)
    O, I = weight.shape[0], weight.shape[1]
    K = weight.shape[3]
    B = x.shape[0]
    H, W = x.shape[-2], x.shape[-1]
    Cin, Cout = I * G, O * G
    Hout = H + 2 * padding - K + 1
    Wout = W + 2 * padding - K + 1

    filt, bias_full = build_filter(weight, bias, group)     # (Cout, Cin, K, K), (Cout,)

    # NCHW -> NHWC + spatial padding (glue, outside the kernel); bf16 halves the DMA.
    x_nchw = x.reshape(B, Cin, H, W)
    x_nhwc = jnp.transpose(x_nchw, (0, 2, 3, 1))
    x_pad = jnp.pad(x_nhwc, ((0, 0), (padding, padding), (padding, padding), (0, 0)))
    x_pad = x_pad.astype(jnp.bfloat16)
    Hp, Wp = x_pad.shape[1], x_pad.shape[2]

    # Folded im2col weights: w_mat[(kh*K + kw)*Cin + ci, co] = filt[co, ci, kh, kw].
    w_mat = jnp.transpose(filt, (2, 3, 1, 0)).reshape(K * K * Cin, Cout)
    w_mat = w_mat.astype(jnp.bfloat16)
    b2d = bias_full.reshape(1, Cout).astype(jnp.float32)

    TH = _pick_row_band(Hout, Wout)     # row band height; M = TH*Wout
    n_bands = Hout // TH
    M = TH * Wout

    kernel = functools.partial(_group_conv2d_kernel, K=K, TH=TH, Wout=Wout)
    out_flat = pl.pallas_call(
        kernel,
        out_shape=jax.ShapeDtypeStruct((B, Hout * Wout, Cout), x.dtype),
        grid=(B, n_bands),
        in_specs=[
            # TODO(synk): for large H*W (esp. v7x's 64 MiB VMEM), tile the input over
            # row bands with a K-1 halo via manual make_async_copy instead of staging
            # the full padded plane per batch element; fine at these small shapes.
            pl.BlockSpec((1, Hp, Wp, Cin), lambda b, h: (b, 0, 0, 0)),
            # TODO(synk): pipeline_mode=pl.Buffered(1) on the grid-invariant w/b specs
            # would shave their (tiny) double-buffer VMEM on v7x.
            pl.BlockSpec((K * K * Cin, Cout), lambda b, h: (0, 0)),     # grid-invariant
            pl.BlockSpec((1, Cout), lambda b, h: (0, 0)),               # grid-invariant
        ],
        # Last dim = real Cout (full extent): ~10.7x less HBM writeback than a
        # 128-lane-padded slab; vst count per band is identical.
        out_specs=pl.BlockSpec((1, M, Cout), lambda b, h: (b, h, 0)),
        compiler_params=pltpu.CompilerParams(
            dimension_semantics=("parallel", "parallel"),
            # 48 MiB fits every generation (v7x has 64 MiB physical); raise towards
            # ~100 MiB on v5e/v6e when staging large planes.
            vmem_limit_bytes=48 * 1024 * 1024,
        ),
    )(x_pad, w_mat, b2d)

    # (B, Hout*Wout, Cout) -> NHWC -> NCHW -> (B, O, G, Hout, Wout)
    out_nhwc = out_flat.reshape(B, Hout, Wout, Cout)
    out = jnp.transpose(out_nhwc, (0, 3, 1, 2)).reshape(B, O, G, Hout, Wout)
    return out


# ------------------------------------- main --------------------------------------

if __name__ == "__main__":
    group = (0, 2)          # C4 rotation group -> groupsize = 4
    O, I, K, pad = 3, 2, 3, 1
    B, H, W = 2, 16, 16
    G = groupsize(group)

    key = jax.random.PRNGKey(0)
    k1, k2, k3 = jax.random.split(key, 3)
    std = 1.0 / (O * I) ** 0.5
    # Module __init__: weight ~ Normal(0, 1/sqrt(O*I)), shape (O, I, G, K, K).
    weight = std * jax.random.normal(k1, (O, I, G, K, K), jnp.float32)
    # Module inits bias to zeros; use deterministic nonzero values to exercise the add.
    bias = 0.1 * jax.random.normal(k2, (O,), jnp.float32)
    x = jax.random.normal(k3, (B, I, G, H, W), jnp.float32)

    out = jax.block_until_ready(group_conv2d_forward(x, weight, bias, group, pad))

    # Pure-JAX reference: conv2d on the replicated filter, exactly like torch forward.
    # Inputs are pre-rounded to bf16 (matching the kernel's bf16 MXU path) and the
    # conv runs at HIGHEST precision, so the only difference is f32 accumulation order.
    filt, bias_full = build_filter(weight, bias, group)
    filt_bf = filt.astype(jnp.bfloat16).astype(jnp.float32)
    x_bf = x.reshape(B, I * G, H, W).astype(jnp.bfloat16).astype(jnp.float32)
    ref = jax.lax.conv_general_dilated(
        x_bf, filt_bf, window_strides=(1, 1), padding=[(pad, pad), (pad, pad)],
        dimension_numbers=("NCHW", "OIHW", "NCHW"),
        precision=jax.lax.Precision.HIGHEST)
    ref = ref + bias_full[None, :, None, None]
    ref = ref.reshape(B, O, G, ref.shape[-2], ref.shape[-1])

    assert out.shape == (B, O, G, H, W), out.shape
    err = float(jnp.max(jnp.abs(out - ref)))
    assert jnp.allclose(out, ref, atol=1e-2, rtol=1e-2), err
    print("KERNEL_OK")
</pallas_src>

<mosaic_0001>
module attributes {stable_mosaic.version = 11 : i64} {
  func.func @_group_conv2d_kernel(%arg0: i32, %arg1: i32, %arg2: memref<1x18x18x8xbf16, #tpu.memory_space<vmem>>, %arg3: memref<72x12xbf16, #tpu.memory_space<vmem>>, %arg4: memref<1x12xf32, #tpu.memory_space<vmem>>, %arg5: memref<1x256x12xf32, #tpu.memory_space<vmem>>) attributes {dimension_semantics = [#tpu.dimension_semantics<parallel>, #tpu.dimension_semantics<parallel>], iteration_bounds = array<i64: 2, 1>, scalar_prefetch = 0 : i64, scratch_operands = 0 : i64, tpu.core_type = #tpu.core_type<tc>, window_params = [{transform_indices = @transform_0, window_bounds = array<i64: 1, 18, 18, 8>}, {pipeline_mode = #tpu.pipeline_mode<synchronous>, transform_indices = @transform_1, window_bounds = array<i64: 72, 12>}, {pipeline_mode = #tpu.pipeline_mode<synchronous>, transform_indices = @transform_2, window_bounds = array<i64: 1, 12>}, {transform_indices = @transform_3, window_bounds = array<i64: 1, 256, 12>}]} {
    %c16_i32 = arith.constant 16 : i32
    %0 = arith.muli %arg1, %c16_i32 : i32
    %1 = tpu.assume_multiple %0, 16 : i32
    %c0_i32 = arith.constant 0 : i32
    %2 = arith.addi %1, %c0_i32 : i32
    %c0 = arith.constant 0 : index
    %3 = arith.index_cast %2 : i32 to index
    %c0_0 = arith.constant 0 : index
    %c0_1 = arith.constant 0 : index
    %4 = vector.load %arg2[%c0, %3, %c0_0, %c0_1] : memref<1x18x18x8xbf16, #tpu.memory_space<vmem>>, vector<1x16x16x8xbf16>
    %5 = vector.shape_cast %4 : vector<1x16x16x8xbf16> to vector<16x16x8xbf16>
    %6 = vector.shape_cast %5 : vector<16x16x8xbf16> to vector<256x8xbf16>
    %c0_i32_2 = arith.constant 0 : i32
    %7 = arith.addi %1, %c0_i32_2 : i32
    %c0_3 = arith.constant 0 : index
    %8 = arith.index_cast %7 : i32 to index
    %c1 = arith.constant 1 : index
    %c0_4 = arith.constant 0 : index
    %9 = vector.load %arg2[%c0_3, %8, %c1, %c0_4] : memref<1x18x18x8xbf16, #tpu.memory_space<vmem>>, vector<1x16x16x8xbf16>
    %10 = vector.shape_cast %9 : vector<1x16x16x8xbf16> to vector<16x16x8xbf16>
    %11 = vector.shape_cast %10 : vector<16x16x8xbf16> to vector<256x8xbf16>
    %c0_i32_5 = arith.constant 0 : i32
    %12 = arith.addi %1, %c0_i32_5 : i32
    %c0_6 = arith.constant 0 : index
    %13 = arith.index_cast %12 : i32 to index
    %c2 = arith.constant 2 : index
    %c0_7 = arith.constant 0 : index
    %14 = vector.load %arg2[%c0_6, %13, %c2, %c0_7] : memref<1x18x18x8xbf16, #tpu.memory_space<vmem>>, vector<1x16x16x8xbf16>
    %15 = vector.shape_cast %14 : vector<1x16x16x8xbf16> to vector<16x16x8xbf16>
    %16 = vector.shape_cast %15 : vector<16x16x8xbf16> to vector<256x8xbf16>
    %c1_i32 = arith.constant 1 : i32
    %17 = arith.addi %1, %c1_i32 : i32
    %c0_8 = arith.constant 0 : index
    %18 = arith.index_cast %17 : i32 to index
    %c0_9 = arith.constant 0 : index
    %c0_10 = arith.constant 0 : index
    %19 = vector.load %arg2[%c0_8, %18, %c0_9, %c0_10] : memref<1x18x18x8xbf16, #tpu.memory_space<vmem>>, vector<1x16x16x8xbf16>
    %20 = vector.shape_cast %19 : vector<1x16x16x8xbf16> to vector<16x16x8xbf16>
    %21 = vector.shape_cast %20 : vector<16x16x8xbf16> to vector<256x8xbf16>
    %c1_i32_11 = arith.constant 1 : i32
    %22 = arith.addi %1, %c1_i32_11 : i32
    %c0_12 = arith.constant 0 : index
    %23 = arith.index_cast %22 : i32 to index
    %c1_13 = arith.constant 1 : index
    %c0_14 = arith.constant 0 : index
    %24 = vector.load %arg2[%c0_12, %23, %c1_13, %c0_14] : memref<1x18x18x8xbf16, #tpu.memory_space<vmem>>, vector<1x16x16x8xbf16>
    %25 = vector.shape_cast %24 : vector<1x16x16x8xbf16> to vector<16x16x8xbf16>
    %26 = vector.shape_cast %25 : vector<16x16x8xbf16> to vector<256x8xbf16>
    %c1_i32_15 = arith.constant 1 : i32
    %27 = arith.addi %1, %c1_i32_15 : i32
    %c0_16 = arith.constant 0 : index
    %28 = arith.index_cast %27 : i32 to index
    %c2_17 = arith.constant 2 : index
    %c0_18 = arith.constant 0 : index
    %29 = vector.load %arg2[%c0_16, %28, %c2_17, %c0_18] : memref<1x18x18x8xbf16, #tpu.memory_space<vmem>>, vector<1x16x16x8xbf16>
    %30 = vector.shape_cast %29 : vector<1x16x16x8xbf16> to vector<16x16x8xbf16>
    %31 = vector.shape_cast %30 : vector<16x16x8xbf16> to vector<256x8xbf16>
    %c2_i32 = arith.constant 2 : i32
    %32 = arith.addi %1, %c2_i32 : i32
    %c0_19 = arith.constant 0 : index
    %33 = arith.index_cast %32 : i32 to index
    %c0_20 = arith.constant 0 : index
    %c0_21 = arith.constant 0 : index
    %34 = vector.load %arg2[%c0_19, %33, %c0_20, %c0_21] : memref<1x18x18x8xbf16, #tpu.memory_space<vmem>>, vector<1x16x16x8xbf16>
    %35 = vector.shape_cast %34 : vector<1x16x16x8xbf16> to vector<16x16x8xbf16>
    %36 = vector.shape_cast %35 : vector<16x16x8xbf16> to vector<256x8xbf16>
    %c2_i32_22 = arith.constant 2 : i32
    %37 = arith.addi %1, %c2_i32_22 : i32
    %c0_23 = arith.constant 0 : index
    %38 = arith.index_cast %37 : i32 to index
    %c1_24 = arith.constant 1 : index
    %c0_25 = arith.constant 0 : index
    %39 = vector.load %arg2[%c0_23, %38, %c1_24, %c0_25] : memref<1x18x18x8xbf16, #tpu.memory_space<vmem>>, vector<1x16x16x8xbf16>
    %40 = vector.shape_cast %39 : vector<1x16x16x8xbf16> to vector<16x16x8xbf16>
    %41 = vector.shape_cast %40 : vector<16x16x8xbf16> to vector<256x8xbf16>
    %c2_i32_26 = arith.constant 2 : i32
    %42 = arith.addi %1, %c2_i32_26 : i32
    %c0_27 = arith.constant 0 : index
    %43 = arith.index_cast %42 : i32 to index
    %c2_28 = arith.constant 2 : index
    %c0_29 = arith.constant 0 : index
    %44 = vector.load %arg2[%c0_27, %43, %c2_28, %c0_29] : memref<1x18x18x8xbf16, #tpu.memory_space<vmem>>, vector<1x16x16x8xbf16>
    %45 = vector.shape_cast %44 : vector<1x16x16x8xbf16> to vector<16x16x8xbf16>
    %46 = vector.shape_cast %45 : vector<16x16x8xbf16> to vector<256x8xbf16>
    %47 = tpu.concatenate %6, %11, %16, %21, %26, %31, %36, %41, %46 in 1 : vector<256x8xbf16>, vector<256x8xbf16>, vector<256x8xbf16>, vector<256x8xbf16>, vector<256x8xbf16>, vector<256x8xbf16>, vector<256x8xbf16>, vector<256x8xbf16>, vector<256x8xbf16> -> vector<256x72xbf16>
    %c0_30 = arith.constant 0 : index
    %c0_31 = arith.constant 0 : index
    %48 = vector.load %arg3[%c0_30, %c0_31] : memref<72x12xbf16, #tpu.memory_space<vmem>>, vector<72x12xbf16>
    %cst = arith.constant dense<0.000000e+00> : vector<256x12xf32>
    %49 = tpu.matmul %47, %48, %cst {dimension_numbers = #tpu.dot_dimension_numbers<[1], [0], [0], [1], [0, 0, 1, 1], [], []>} : vector<256x72xbf16>, vector<72x12xbf16>, vector<256x12xf32> -> vector<256x12xf32>
    %c0_32 = arith.constant 0 : index
    %c0_33 = arith.constant 0 : index
    %50 = vector.load %arg4[%c0_32, %c0_33] : memref<1x12xf32, #tpu.memory_space<vmem>>, vector<1x12xf32>
    %51 = vector.broadcast %50 : vector<1x12xf32> to vector<256x12xf32>
    %52 = arith.addf %49, %51 : vector<256x12xf32>
    %c0_34 = arith.constant 0 : index
    %c0_35 = arith.constant 0 : index
    %c0_36 = arith.constant 0 : index
    %53 = vector.load %arg5[%c0_34, %c0_35, %c0_36] : memref<1x256x12xf32, #tpu.memory_space<vmem>>, vector<1x256x12xf32>
    %54 = vector.shape_cast %53 : vector<1x256x12xf32> to vector<256x12xf32>
    %55 = vector.shape_cast %52 : vector<256x12xf32> to vector<1x256x12xf32>
    tpu.vector_store %arg5[%c0_34, %c0_35, %c0_36], %55 {strides = array<i32>} : memref<1x256x12xf32, #tpu.memory_space<vmem>>, vector<1x256x12xf32>,
    return
  }
  func.func @transform_0(%arg0: i32, %arg1: i32) -> (i32, i32, i32, i32) {
    %c0_i32 = arith.constant 0 : i32
    %c0_i32_0 = arith.constant 0 : i32
    %c0_i32_1 = arith.constant 0 : i32
    %c0_i32_2 = arith.constant 0 : i32
    return %arg0, %c0_i32, %c0_i32_0, %c0_i32_1 : i32, i32, i32, i32
  }
  func.func @transform_1(%arg0: i32, %arg1: i32) -> (i32, i32) {
    %c0_i32 = arith.constant 0 : i32
    %c0_i32_0 = arith.constant 0 : i32
    %c0_i32_1 = arith.constant 0 : i32
    return %c0_i32, %c0_i32_0 : i32, i32
  }
  func.func @transform_2(%arg0: i32, %arg1: i32) -> (i32, i32) {
    %c0_i32 = arith.constant 0 : i32
    %c0_i32_0 = arith.constant 0 : i32
    %c0_i32_1 = arith.constant 0 : i32
    return %c0_i32, %c0_i32_0 : i32, i32
  }
  func.func @transform_3(%arg0: i32, %arg1: i32) -> (i32, i32, i32) {
    %c0_i32 = arith.constant 0 : i32
    %c0_i32_0 = arith.constant 0 : i32
    return %arg0, %arg1, %c0_i32 : i32, i32, i32
  }
}

</mosaic_0001>

<llo_original>
// kernel: tpu_custom_call.1
$region0: #{tpu_custom_call.1}
  #allocation0 [shape = 'u32[]', space=smem, size = 0x4, offset = 0x4, fixed_abs, tag = 'smem constant byte address 0x4 - core index']
  #allocation1 [shape = 'u32[72,128]{1,0:T(1,128)}', space=vmem, size = 0x9000, scoped, tag = 'internal scratch']
  %s0 = inlined_call_operand.vmem [shape: bf16[2,18,18,8], index: 0, kind: input, shape index: {}]
  %s1 = inlined_call_operand.vmem [shape: bf16[72,12], index: 1, kind: input, shape index: {}]
  %s2 = inlined_call_operand.vmem [shape: f32[1,12], index: 2, kind: input, shape index: {}]
  %s3 = inlined_call_operand.vmem [shape: f32[2,256,12], index: 3, kind: output, shape index: {}]
  %s4 = sld [smem:[#allocation0]]
  $region45: #{tpu_custom_call.1} parent=0
    _
  %s6 = ssub.s32 1, %s4
  %s7 = scalar_select 0, %s6, %s4
  loop: start=0, step=1, limit=4
  $region2: #{tpu_custom_call.1} parent=0 // loop_pre_header
    _
  $region3: #{tpu_custom_call.1} parent=0 // loop_header
    %s9 = sphi 0, %s13
    %p10 = scmp.ge.s32.totalorder %s9, 4
    %s16 = sphi 0, %s28
    %s17 = sphi 0, %s24
    %s18 = sphi 0, %s16
    %s19 = sphi 0, %s17
    %s20 = sphi 0, %s18
    %s21 = sphi 0, %s19
    %s31 = sphi 0, %s33
    %s34 = sphi 0, %s31
    %s35 = sphi 0, %s34
    %s51 = sphi 0, %s35
    %s55 = sphi 0, %s55
    %s57 = sphi 0, %s55
    %s58 = sphi 0, %s57
    %s72 = sphi 0, %s58
    %s76 = sphi 0, %s76
    %s78 = sphi 0, %s76
    %s79 = sphi 0, %s78
    %s93 = sphi 0, %s79
    %s101 = sphi 0, %s103
    %s104 = sphi 0, %s101
    %s105 = sphi 0, %s104
    %s121 = sphi 0, %s105
  $region4: #{tpu_custom_call.1} parent=0 // loop_header_branch
    %12 = sbr.rel (%p10) target = $region8
  $region5: #{tpu_custom_call.1} parent=0 // loop_body
    %s14 = ssub.s32 %s9, 1
    %s15 = ssub.s32 %s9, 2
    %s22 = sadd.s32 1, %s17
    %p23 = scmp.ge.s32.totalorder %s22, 1
    %s24 = scalar_select %p23, 0, %s22
    %s25 = sadd.s32 1, %s16
    %s26 = scalar_select %p23, %s25, %s16
    %p27 = scmp.ge.s32.totalorder %s26, 2
    %s28 = scalar_select %p27, 0, %s26
    %s29 = ssub.s32 %s16, %s28
    %p30 = scmp.eq.s32.totalorder %s29, 0
    %s32 = sadd.s32 %s31, 1
    %s33 = scalar_select %p30, %s31, %s32
    %p36 = pneg %p30
    %p37 = scmp.eq.s32.totalorder %s9, 1
    %p38 = por %p36, %p37
    %p39 = scmp.ne.s32.totalorder %s31, %s34
    %p40 = scmp.eq.s32.totalorder %s9, 0
    %p41 = por %p39, %p40
    %p42 = scmp.ne.s32.totalorder %s31, %s34
    %p43 = scmp.eq.s32.totalorder %s14, 1
    %p44 = por %p42, %p43
    %p45 = scmp.ne.s32.totalorder %s34, %s35
    %p46 = scmp.eq.s32.totalorder %s14, 0
    %p47 = por %p45, %p46
    %p48 = scmp.ne.s32.totalorder %s34, %s35
    %p49 = scmp.eq.s32.totalorder %s15, 1
    %p50 = por %p48, %p49
    %p52 = scmp.ne.s32.totalorder %s35, %s51
    %p53 = scmp.eq.s32.totalorder %s15, 0
    %p54 = por %p52, %p53
    %s56 = sadd.s32 %s55, 1
    %p59 = scmp.eq.s32.totalorder %s9, 1
    %p60 = scmp.ne.s32.totalorder %s55, %s57
    %p61 = scmp.eq.s32.totalorder %s9, 0
    %p62 = por %p60, %p61
    %p63 = scmp.ne.s32.totalorder %s55, %s57
    %p64 = scmp.eq.s32.totalorder %s14, 1
    %p65 = por %p63, %p64
    %p66 = scmp.ne.s32.totalorder %s57, %s58
    %p67 = scmp.eq.s32.totalorder %s14, 0
    %p68 = por %p66, %p67
    %p69 = scmp.ne.s32.totalorder %s57, %s58
    %p70 = scmp.eq.s32.totalorder %s15, 1
    %p71 = por %p69, %p70
    %p73 = scmp.ne.s32.totalorder %s58, %s72
    %p74 = scmp.eq.s32.totalorder %s15, 0
    %p75 = por %p73, %p74
    %s77 = sadd.s32 %s76, 1
    %p80 = scmp.eq.s32.totalorder %s9, 1
    %p81 = scmp.ne.s32.totalorder %s76, %s78
    %p82 = scmp.eq.s32.totalorder %s9, 0
    %p83 = por %p81, %p82
    %p84 = scmp.ne.s32.totalorder %s76, %s78
    %p85 = scmp.eq.s32.totalorder %s14, 1
    %p86 = por %p84, %p85
    %p87 = scmp.ne.s32.totalorder %s78, %s79
    %p88 = scmp.eq.s32.totalorder %s14, 0
    %p89 = por %p87, %p88
    %p90 = scmp.ne.s32.totalorder %s78, %s79
    %p91 = scmp.eq.s32.totalorder %s15, 1
    %p92 = por %p90, %p91
    %p94 = scmp.ne.s32.totalorder %s79, %s93
    %p95 = scmp.eq.s32.totalorder %s15, 0
    %p96 = por %p94, %p95
    %s97 = ssub.s32 %s16, %s28
    %s98 = ssub.s32 %s17, %s24
    %s99 = sor.u32 %s97, %s98
    %p100 = scmp.eq.s32.totalorder %s99, 0
    %s102 = sadd.s32 %s101, 1
    %s103 = scalar_select %p100, %s101, %s102
    %p106 = pneg %p100
    %p107 = scmp.eq.s32.totalorder %s9, 1
    %p108 = por %p106, %p107
    %p109 = scmp.ne.s32.totalorder %s101, %s104
    %p110 = scmp.eq.s32.totalorder %s9, 0
    %p111 = por %p109, %p110
    %p112 = scmp.ne.s32.totalorder %s101, %s104
    %p113 = scmp.eq.s32.totalorder %s14, 1
    %p114 = por %p112, %p113
    %p115 = scmp.ne.s32.totalorder %s104, %s105
    %p116 = scmp.eq.s32.totalorder %s14, 0
    %p117 = por %p115, %p116
    %p118 = scmp.ne.s32.totalorder %s104, %s105
    %p119 = scmp.eq.s32.totalorder %s15, 1
    %p120 = por %p118, %p119
    %p122 = scmp.ne.s32.totalorder %s105, %s121
    %p123 = scmp.eq.s32.totalorder %s15, 0
    %p124 = por %p122, %p123
    %p125 = scmp.le.s32.totalorder 1, %s9
    %p126 = scmp.lt.s32.totalorder %s9, 3
    %p127 = pnand %p125, %p126
    %p128 = pneg %p127
    // Predicated region
    $region9: #{tpu_custom_call.1} parent=5 // pred_check
      _
    $region10: #{tpu_custom_call.1} parent=5 // pred_check_branch
      %130 = sbr.rel (%p127) target = $region12
    $region11: #{tpu_custom_call.1} parent=5 // pred_region
      %s131 = ssub.s32 %s9, 1
      // Predicated region
      $region13: #{tpu_custom_call.1} parent=11 // pred_check
        %p132 = pneg %p68
      $region14: #{tpu_custom_call.1} parent=11 // pred_check_branch
        %134 = sbr.rel (%p132) target = $region16
      $region15: #{tpu_custom_call.1} parent=11 // pred_region
        _
      $region16: #{tpu_custom_call.1} parent=11 // pred_fallthru
        _
      // Predicated region
      $region17: #{tpu_custom_call.1} parent=11 // pred_check
        %p135 = pneg %p89
      $region18: #{tpu_custom_call.1} parent=11 // pred_check_branch
        %137 = sbr.rel (%p135) target = $region20
      $region19: #{tpu_custom_call.1} parent=11 // pred_region
        _
      $region20: #{tpu_custom_call.1} parent=11 // pred_fallthru
        _
    $region12: #{tpu_custom_call.1} parent=5 // pred_fallthru
      _
    %p138 = scmp.lt.s32.totalorder %s9, 2
    // Predicated region
    $region21: #{tpu_custom_call.1} parent=5 // pred_check
      %p139 = pneg %p138
    $region22: #{tpu_custom_call.1} parent=5 // pred_check_branch
      %141 = sbr.rel (%p139) target = $region24
    $region23: #{tpu_custom_call.1} parent=5 // pred_region
      // Predicated region
      $region25: #{tpu_custom_call.1} parent=23 // pred_check
        %p142 = pneg %p41
      $region26: #{tpu_custom_call.1} parent=23 // pred_check_branch
        %144 = sbr.rel (%p142) target = $region28
      $region27: #{tpu_custom_call.1} parent=23 // pred_region
        %p145 = scmp.lt.s32.totalorder %s16, 1
        %s146 = scalar_select %p145, %s16, 1
        %s147 = smul.addr %s146, 54
        %s148 = smul.addr %s147, 4
        %s149 = scalar_lea.vmem %s0, %s148
      $region28: #{tpu_custom_call.1} parent=23 // pred_fallthru
        _
    $region24: #{tpu_custom_call.1} parent=5 // pred_fallthru
      _
    %p150 = scmp.le.s32.totalorder 1, %s9
    %p151 = scmp.lt.s32.totalorder %s9, 3
    %p152 = pnand %p150, %p151
    %p153 = pneg %p152
    // Predicated region
    $region29: #{tpu_custom_call.1} parent=5 // pred_check
      _
    $region30: #{tpu_custom_call.1} parent=5 // pred_check_branch
      %155 = sbr.rel (%p152) target = $region32
    $region31: #{tpu_custom_call.1} parent=5 // pred_region
      %s156 = ssub.s32 %s9, 1
      %p157 = scmp.lt.s32.totalorder %s18, 1
      %s158 = scalar_select %p157, %s18, 1
      %s159 = smul.addr %s158, 54
      %s160 = smul.addr %s159, 4
      %s161 = scalar_lea.vmem %s0, %s160
      %p162 = pneg %p47
      %p163 = pneg %p44
      %p164 = pneg %p68
      %p165 = pneg %p65
      %p166 = pneg %p89
      %p167 = pneg %p86
      %p168 = pneg %p117
      %p169 = pneg %p114
      %s170 = smul.u32 32, %s19
      %p171 = scmp.lt.s32.totalorder %s18, 1
      %s172 = scalar_select %p171, %s18, 1
      %p173 = scmp.lt.s32.totalorder %s170, 31
      %s174 = scalar_select %p173, %s170, 31
      %s175 = smul.addr %s172, 32
      %s176 = sadd.s32 %s174, %s175
      %s177 = smul.addr %s176, 8
      %s178 = scalar_lea.vmem %s3, %s177
      %p179 = scmp.lt.s32.totalorder %s18, 1
      %s180 = scalar_select %p179, %s18, 1
      %s181 = smul.addr %s180, 54
      %s182 = smul.addr %s181, 4
      %s183 = scalar_lea.vmem %s0, %s182
      %s184 = smul.u32 32, %s19
      %p185 = scmp.lt.s32.totalorder %s18, 1
      %s186 = scalar_select %p185, %s18, 1
      %p187 = scmp.lt.s32.totalorder %s184, 31
      %s188 = scalar_select %p187, %s184, 31
      %s189 = smul.addr %s186, 32
      %s190 = sadd.s32 %s188, %s189
      %s191 = smul.addr %s190, 8
      %s192 = scalar_lea.vmem %s3, %s191
      %s193 = smul.u32 32, %s19
      %s195 = smul.u32 %s19, 16
      %s196 = smul.u32 %s195, 3
      %s197 = smul.addr %s196, 4
      %s198 = scalar_lea.vmem %s183, %s197
      %v199 = vld [vmem:[%s198] sm:$0xf]
      %v200 = vld [vmem:[%s198 + $0x4] sm:$0xf]
      %v201 = vld [vmem:[%s198 + $0xc] sm:$0xf]
      %v202 = vld [vmem:[%s198 + $0x10] sm:$0xf]
      %v203 = vld [vmem:[%s198 + $0x18] sm:$0xf]
      %v204 = vld [vmem:[%s198 + $0x1c] sm:$0xf]
      %v205 = vld [vmem:[%s198 + $0x24] sm:$0xf]
      %v206 = vld [vmem:[%s198 + $0x28] sm:$0xf]
      %v207 = vld [vmem:[%s198 + $0x30] sm:$0xf]
      %v208 = vld [vmem:[%s198 + $0x34] sm:$0xf]
      %v209 = vld [vmem:[%s198 + $0x3c] sm:$0xf]
      %v210 = vld [vmem:[%s198 + $0x40] sm:$0xf]
      %v211 = vld [vmem:[%s198 + $0x48] sm:$0xf]
      %v212 = vld [vmem:[%s198 + $0x4c] sm:$0xf]
      %v213 = vld [vmem:[%s198 + $0x54] sm:$0xf]
      %v214 = vld [vmem:[%s198 + $0x58] sm:$0xf]
      %v215 = vld [vmem:[%s198 + $0x60] sm:$0xf]
      %v216 = vld [vmem:[%s198 + $0x64] sm:$0xf]
      %v217 = vld [vmem:[%s198 + $0x6c] sm:$0xf]
      %v218 = vld [vmem:[%s198 + $0x70] sm:$0xf]
      %v219 = vld [vmem:[%s198 + $0x78] sm:$0xf]
      %v220 = vld [vmem:[%s198 + $0x7c] sm:$0xf]
      %v221 = vld [vmem:[%s198 + $0x84] sm:$0xf]
      %v222 = vld [vmem:[%s198 + $0x88] sm:$0xf]
      %v223 = vld [vmem:[%s198 + $0x90] sm:$0xf]
      %v224 = vld [vmem:[%s198 + $0x94] sm:$0xf]
      %v225 = vld [vmem:[%s198 + $0x9c] sm:$0xf]
      %v226 = vld [vmem:[%s198 + $0xa0] sm:$0xf]
      %v227 = vld [vmem:[%s198 + $0xa8] sm:$0xf]
      %v228 = vld [vmem:[%s198 + $0xac] sm:$0xf]
      %v229 = vld [vmem:[%s198 + $0xb4] sm:$0xf]
      %v230 = vld [vmem:[%s198 + $0xb8] sm:$0xf]
      %v231 = vld [vmem:[%s198 + $0x8] sm:$0x1]
      %v232 = vld [vmem:[%s198 + $0x14] sm:$0x1]
      %v233 = vld [vmem:[%s198 + $0x20] sm:$0x1]
      %v234 = vld [vmem:[%s198 + $0x2c] sm:$0x1]
      %v235 = vld [vmem:[%s198 + $0x38] sm:$0x1]
      %v236 = vld [vmem:[%s198 + $0x44] sm:$0x1]
      %v237 = vld [vmem:[%s198 + $0x50] sm:$0x1]
      %v238 = vld [vmem:[%s198 + $0x5c] sm:$0x1]
      %v239 = vld [vmem:[%s198 + $0x68] sm:$0x1]
      %v240 = vld [vmem:[%s198 + $0x74] sm:$0x1]
      %v241 = vld [vmem:[%s198 + $0x80] sm:$0x1]
      %v242 = vld [vmem:[%s198 + $0x8c] sm:$0x1]
      %v243 = vld [vmem:[%s198 + $0x98] sm:$0x1]
      %v244 = vld [vmem:[%s198 + $0xa4] sm:$0x1]
      %v245 = vld [vmem:[%s198 + $0xb0] sm:$0x1]
      %v246 = vld [vmem:[%s198 + $0xbc] sm:$0x1]
      %vm247 = vsmask.f32 3328
      %vm248 = vsmask.f32 7440
      %vm249 = vmor %vm247, %vm248
      %v251 = vshrl.u32 %v199, 16
      %v253 = vrot.slane %v251, 4
      %v254 = vshll.u32 %v199, 16
      %v256 = vrot.slane %v254, 5
      %v257 = vor.u32 %v253, %v256
      %v258 = vrot.slane %v257, 4
      %v260 = vshll.u32 %v200, 16
      %v262 = vrot.slane %v260, 5
      %v263 = vsel %vm249, %v258, %v262
      %v264 = vshrl.u32 %v200, 16
      %v266 = vrot.slane %v264, 4
      %v267 = vor.u32 %v266, %v262
      %v268 = vrot.slane %v267, 4
      %v270 = vshll.u32 %v231, 16
      %v272 = vrot.slane %v270, 5
      %v273 = vsel %vm249, %v268, %v272
      %v275 = vshrl.u32 %v201, 16
      %v277 = vrot.slane %v275, 4
      %v278 = vshll.u32 %v201, 16
      %v280 = vrot.slane %v278, 5
      %v281 = vor.u32 %v277, %v280
      %v282 = vrot.slane %v281, 4
      %v284 = vshll.u32 %v202, 16
      %v286 = vrot.slane %v284, 5
      %v287 = vsel %vm249, %v282, %v286
      %v288 = vshrl.u32 %v202, 16
      %v290 = vrot.slane %v288, 4
      %v291 = vor.u32 %v290, %v286
      %v292 = vrot.slane %v291, 4
      %v294 = vshll.u32 %v232, 16
      %v296 = vrot.slane %v294, 5
      %v297 = vsel %vm249, %v292, %v296
      %v299 = vshrl.u32 %v203, 16
      %v301 = vrot.slane %v299, 4
      %v302 = vshll.u32 %v203, 16
      %v304 = vrot.slane %v302, 5
      %v305 = vor.u32 %v301, %v304
      %v306 = vrot.slane %v305, 4
      %v308 = vshll.u32 %v204, 16
      %v310 = vrot.slane %v308, 5
      %v311 = vsel %vm249, %v306, %v310
      %v312 = vshrl.u32 %v204, 16
      %v314 = vrot.slane %v312, 4
      %v315 = vor.u32 %v314, %v310
      %v316 = vrot.slane %v315, 4
      %v318 = vshll.u32 %v233, 16
      %v320 = vrot.slane %v318, 5
      %v321 = vsel %vm249, %v316, %v320
      %v323 = vshrl.u32 %v205, 16
      %v325 = vrot.slane %v323, 4
      %v326 = vshll.u32 %v205, 16
      %v328 = vrot.slane %v326, 5
      %v329 = vor.u32 %v325, %v328
      %v330 = vrot.slane %v329, 4
      %v332 = vshll.u32 %v206, 16
      %v334 = vrot.slane %v332, 5
      %v335 = vsel %vm249, %v330, %v334
      %v336 = vshrl.u32 %v206, 16
      %v338 = vrot.slane %v336, 4
      %v339 = vor.u32 %v338, %v334
      %v340 = vrot.slane %v339, 4
      %v342 = vshll.u32 %v234, 16
      %v344 = vrot.slane %v342, 5
      %v345 = vsel %vm249, %v340, %v344
      %v347 = vshrl.u32 %v207, 16
      %v349 = vrot.slane %v347, 4
      %v350 = vshll.u32 %v207, 16
      %v352 = vrot.slane %v350, 5
      %v353 = vor.u32 %v349, %v352
      %v354 = vrot.slane %v353, 4
      %v356 = vshll.u32 %v208, 16
      %v358 = vrot.slane %v356, 5
      %v359 = vsel %vm249, %v354, %v358
      %v360 = vshrl.u32 %v208, 16
      %v362 = vrot.slane %v360, 4
      %v363 = vor.u32 %v362, %v358
      %v364 = vrot.slane %v363, 4
      %v366 = vshll.u32 %v235, 16
      %v368 = vrot.slane %v366, 5
      %v369 = vsel %vm249, %v364, %v368
      %v371 = vshrl.u32 %v209, 16
      %v373 = vrot.slane %v371, 4
      %v374 = vshll.u32 %v209, 16
      %v376 = vrot.slane %v374, 5
      %v377 = vor.u32 %v373, %v376
      %v378 = vrot.slane %v377, 4
      %v380 = vshll.u32 %v210, 16
      %v382 = vrot.slane %v380, 5
      %v383 = vsel %vm249, %v378, %v382
      %v384 = vshrl.u32 %v210, 16
      %v386 = vrot.slane %v384, 4
      %v387 = vor.u32 %v386, %v382
      %v388 = vrot.slane %v387, 4
      %v390 = vshll.u32 %v236, 16
      %v392 = vrot.slane %v390, 5
      %v393 = vsel %vm249, %v388, %v392
      %v395 = vshrl.u32 %v211, 16
      %v397 = vrot.slane %v395, 4
      %v398 = vshll.u32 %v211, 16
      %v400 = vrot.slane %v398, 5
      %v401 = vor.u32 %v397, %v400
      %v402 = vrot.slane %v401, 4
      %v404 = vshll.u32 %v212, 16
      %v406 = vrot.slane %v404, 5
      %v407 = vsel %vm249, %v402, %v406
      %v408 = vshrl.u32 %v212, 16
      %v410 = vrot.slane %v408, 4
      %v411 = vor.u32 %v410, %v406
      %v412 = vrot.slane %v411, 4
      %v414 = vshll.u32 %v237, 16
      %v416 = vrot.slane %v414, 5
      %v417 = vsel %vm249, %v412, %v416
      %v419 = vshrl.u32 %v213, 16
      %v421 = vrot.slane %v419, 4
      %v422 = vshll.u32 %v213, 16
      %v424 = vrot.slane %v422, 5
      %v425 = vor.u32 %v421, %v424
      %v426 = vrot.slane %v425, 4
      %v428 = vshll.u32 %v214, 16
      %v430 = vrot.slane %v428, 5
      %v431 = vsel %vm249, %v426, %v430
      %v432 = vshrl.u32 %v214, 16
      %v434 = vrot.slane %v432, 4
      %v435 = vor.u32 %v434, %v430
      %v436 = vrot.slane %v435, 4
      %v438 = vshll.u32 %v238, 16
      %v440 = vrot.slane %v438, 5
      %v441 = vsel %vm249, %v436, %v440
      %v443 = vshrl.u32 %v215, 16
      %v445 = vrot.slane %v443, 4
      %v446 = vshll.u32 %v215, 16
      %v448 = vrot.slane %v446, 5
      %v449 = vor.u32 %v445, %v448
      %v450 = vrot.slane %v449, 4
      %v452 = vshll.u32 %v216, 16
      %v454 = vrot.slane %v452, 5
      %v455 = vsel %vm249, %v450, %v454
      %v456 = vshrl.u32 %v216, 16
      %v458 = vrot.slane %v456, 4
      %v459 = vor.u32 %v458, %v454
      %v460 = vrot.slane %v459, 4
      %v462 = vshll.u32 %v239, 16
      %v464 = vrot.slane %v462, 5
      %v465 = vsel %vm249, %v460, %v464
      %v467 = vshrl.u32 %v217, 16
      %v469 = vrot.slane %v467, 4
      %v470 = vshll.u32 %v217, 16
      %v472 = vrot.slane %v470, 5
      %v473 = vor.u32 %v469, %v472
      %v474 = vrot.slane %v473, 4
      %v476 = vshll.u32 %v218, 16
      %v478 = vrot.slane %v476, 5
      %v479 = vsel %vm249, %v474, %v478
      %v480 = vshrl.u32 %v218, 16
      %v482 = vrot.slane %v480, 4
      %v483 = vor.u32 %v482, %v478
      %v484 = vrot.slane %v483, 4
      %v486 = vshll.u32 %v240, 16
      %v488 = vrot.slane %v486, 5
      %v489 = vsel %vm249, %v484, %v488
      %v491 = vshrl.u32 %v219, 16
      %v493 = vrot.slane %v491, 4
      %v494 = vshll.u32 %v219, 16
      %v496 = vrot.slane %v494, 5
      %v497 = vor.u32 %v493, %v496
      %v498 = vrot.slane %v497, 4
      %v500 = vshll.u32 %v220, 16
      %v502 = vrot.slane %v500, 5
      %v503 = vsel %vm249, %v498, %v502
      %v504 = vshrl.u32 %v220, 16
      %v506 = vrot.slane %v504, 4
      %v507 = vor.u32 %v506, %v502
      %v508 = vrot.slane %v507, 4
      %v510 = vshll.u32 %v241, 16
      %v512 = vrot.slane %v510, 5
      %v513 = vsel %vm249, %v508, %v512
      %v515 = vshrl.u32 %v221, 16
      %v517 = vrot.slane %v515, 4
      %v518 = vshll.u32 %v221, 16
      %v520 = vrot.slane %v518, 5
      %v521 = vor.u32 %v517, %v520
      %v522 = vrot.slane %v521, 4
      %v524 = vshll.u32 %v222, 16
      %v526 = vrot.slane %v524, 5
      %v527 = vsel %vm249, %v522, %v526
      %v528 = vshrl.u32 %v222, 16
      %v530 = vrot.slane %v528, 4
      %v531 = vor.u32 %v530, %v526
      %v532 = vrot.slane %v531, 4
      %v534 = vshll.u32 %v242, 16
      %v536 = vrot.slane %v534, 5
      %v537 = vsel %vm249, %v532, %v536
      %v539 = vshrl.u32 %v223, 16
      %v541 = vrot.slane %v539, 4
      %v542 = vshll.u32 %v223, 16
      %v544 = vrot.slane %v542, 5
      %v545 = vor.u32 %v541, %v544
      %v546 = vrot.slane %v545, 4
      %v548 = vshll.u32 %v224, 16
      %v550 = vrot.slane %v548, 5
      %v551 = vsel %vm249, %v546, %v550
      %v552 = vshrl.u32 %v224, 16
      %v554 = vrot.slane %v552, 4
      %v555 = vor.u32 %v554, %v550
      %v556 = vrot.slane %v555, 4
      %v558 = vshll.u32 %v243, 16
      %v560 = vrot.slane %v558, 5
      %v561 = vsel %vm249, %v556, %v560
      %v563 = vshrl.u32 %v225, 16
      %v565 = vrot.slane %v563, 4
      %v566 = vshll.u32 %v225, 16
      %v568 = vrot.slane %v566, 5
      %v569 = vor.u32 %v565, %v568
      %v570 = vrot.slane %v569, 4
      %v572 = vshll.u32 %v226, 16
      %v574 = vrot.slane %v572, 5
      %v575 = vsel %vm249, %v570, %v574
      %v576 = vshrl.u32 %v226, 16
      %v578 = vrot.slane %v576, 4
      %v579 = vor.u32 %v578, %v574
      %v580 = vrot.slane %v579, 4
      %v582 = vshll.u32 %v244, 16
      %v584 = vrot.slane %v582, 5
      %v585 = vsel %vm249, %v580, %v584
      %v587 = vshrl.u32 %v227, 16
      %v589 = vrot.slane %v587, 4
      %v590 = vshll.u32 %v227, 16
      %v592 = vrot.slane %v590, 5
      %v593 = vor.u32 %v589, %v592
      %v594 = vrot.slane %v593, 4
      %v596 = vshll.u32 %v228, 16
      %v598 = vrot.slane %v596, 5
      %v599 = vsel %vm249, %v594, %v598
      %v600 = vshrl.u32 %v228, 16
      %v602 = vrot.slane %v600, 4
      %v603 = vor.u32 %v602, %v598
      %v604 = vrot.slane %v603, 4
      %v606 = vshll.u32 %v245, 16
      %v608 = vrot.slane %v606, 5
      %v609 = vsel %vm249, %v604, %v608
      %v611 = vshrl.u32 %v229, 16
      %v613 = vrot.slane %v611, 4
      %v614 = vshll.u32 %v229, 16
      %v616 = vrot.slane %v614, 5
      %v617 = vor.u32 %v613, %v616
      %v618 = vrot.slane %v617, 4
      %v620 = vshll.u32 %v230, 16
      %v622 = vrot.slane %v620, 5
      %v623 = vsel %vm249, %v618, %v622
      %v624 = vshrl.u32 %v230, 16
      %v626 = vrot.slane %v624, 4
      %v627 = vor.u32 %v626, %v622
      %v628 = vrot.slane %v627, 4
      %v630 = vshll.u32 %v246, 16
      %v632 = vrot.slane %v630, 5
      %v633 = vsel %vm249, %v628, %v632
      %v634 = vld [vmem:[%s198] sm:$0xe]
      %v635 = vld [vmem:[%s198 + $0xc] sm:$0xe]
      %v636 = vld [vmem:[%s198 + $0x18] sm:$0xe]
      %v637 = vld [vmem:[%s198 + $0x24] sm:$0xe]
      %v638 = vld [vmem:[%s198 + $0x30] sm:$0xe]
      %v639 = vld [vmem:[%s198 + $0x3c] sm:$0xe]
      %v640 = vld [vmem:[%s198 + $0x48] sm:$0xe]
      %v641 = vld [vmem:[%s198 + $0x54] sm:$0xe]
      %v642 = vld [vmem:[%s198 + $0x60] sm:$0xe]
      %v643 = vld [vmem:[%s198 + $0x6c] sm:$0xe]
      %v644 = vld [vmem:[%s198 + $0x78] sm:$0xe]
      %v645 = vld [vmem:[%s198 + $0x84] sm:$0xe]
      %v646 = vld [vmem:[%s198 + $0x90] sm:$0xe]
      %v647 = vld [vmem:[%s198 + $0x9c] sm:$0xe]
      %v648 = vld [vmem:[%s198 + $0xa8] sm:$0xe]
      %v649 = vld [vmem:[%s198 + $0xb4] sm:$0xe]
      %vm698 = vcmask 1042432
      %vm699 = vcmask 1046532
      %vm700 = vmor %vm698, %vm699
      %v701 = vrot.slane %v634, 5
      %v702 = vrot.slane %v701, 4
      %v703 = vrot.slane %v200, 5
      %v704 = vsel %vm700, %v702, %v703
      %v705 = vrot.slane %v703, 4
      %v706 = vrot.slane %v231, 5
      %v707 = vsel %vm700, %v705, %v706
      %v708 = vrot.slane %v635, 5
      %v709 = vrot.slane %v708, 4
      %v710 = vrot.slane %v202, 5
      %v711 = vsel %vm700, %v709, %v710
      %v712 = vrot.slane %v710, 4
      %v713 = vrot.slane %v232, 5
      %v714 = vsel %vm700, %v712, %v713
      %v715 = vrot.slane %v636, 5
      %v716 = vrot.slane %v715, 4
      %v717 = vrot.slane %v204, 5
      %v718 = vsel %vm700, %v716, %v717
      %v719 = vrot.slane %v717, 4
      %v720 = vrot.slane %v233, 5
      %v721 = vsel %vm700, %v719, %v720
      %v722 = vrot.slane %v637, 5
      %v723 = vrot.slane %v722, 4
      %v724 = vrot.slane %v206, 5
      %v725 = vsel %vm700, %v723, %v724
      %v726 = vrot.slane %v724, 4
      %v727 = vrot.slane %v234, 5
      %v728 = vsel %vm700, %v726, %v727
      %v729 = vrot.slane %v638, 5
      %v730 = vrot.slane %v729, 4
      %v731 = vrot.slane %v208, 5
      %v732 = vsel %vm700, %v730, %v731
      %v733 = vrot.slane %v731, 4
      %v734 = vrot.slane %v235, 5
      %v735 = vsel %vm700, %v733, %v734
      %v736 = vrot.slane %v639, 5
      %v737 = vrot.slane %v736, 4
      %v738 = vrot.slane %v210, 5
      %v739 = vsel %vm700, %v737, %v738
      %v740 = vrot.slane %v738, 4
      %v741 = vrot.slane %v236, 5
      %v742 = vsel %vm700, %v740, %v741
      %v743 = vrot.slane %v640, 5
      %v744 = vrot.slane %v743, 4
      %v745 = vrot.slane %v212, 5
      %v746 = vsel %vm700, %v744, %v745
      %v747 = vrot.slane %v745, 4
      %v748 = vrot.slane %v237, 5
      %v749 = vsel %vm700, %v747, %v748
      %v750 = vrot.slane %v641, 5
      %v751 = vrot.slane %v750, 4
      %v752 = vrot.slane %v214, 5
      %v753 = vsel %vm700, %v751, %v752
      %v754 = vrot.slane %v752, 4
      %v755 = vrot.slane %v238, 5
      %v756 = vsel %vm700, %v754, %v755
      %v757 = vrot.slane %v642, 5
      %v758 = vrot.slane %v757, 4
      %v759 = vrot.slane %v216, 5
      %v760 = vsel %vm700, %v758, %v759
      %v761 = vrot.slane %v759, 4
      %v762 = vrot.slane %v239, 5
      %v763 = vsel %vm700, %v761, %v762
      %v764 = vrot.slane %v643, 5
      %v765 = vrot.slane %v764, 4
      %v766 = vrot.slane %v218, 5
      %v767 = vsel %vm700, %v765, %v766
      %v768 = vrot.slane %v766, 4
      %v769 = vrot.slane %v240, 5
      %v770 = vsel %vm700, %v768, %v769
      %v771 = vrot.slane %v644, 5
      %v772 = vrot.slane %v771, 4
      %v773 = vrot.slane %v220, 5
      %v774 = vsel %vm700, %v772, %v773
      %v775 = vrot.slane %v773, 4
      %v776 = vrot.slane %v241, 5
      %v777 = vsel %vm700, %v775, %v776
      %v778 = vrot.slane %v645, 5
      %v779 = vrot.slane %v778, 4
      %v780 = vrot.slane %v222, 5
      %v781 = vsel %vm700, %v779, %v780
      %v782 = vrot.slane %v780, 4
      %v783 = vrot.slane %v242, 5
      %v784 = vsel %vm700, %v782, %v783
      %v785 = vrot.slane %v646, 5
      %v786 = vrot.slane %v785, 4
      %v787 = vrot.slane %v224, 5
      %v788 = vsel %vm700, %v786, %v787
      %v789 = vrot.slane %v787, 4
      %v790 = vrot.slane %v243, 5
      %v791 = vsel %vm700, %v789, %v790
      %v792 = vrot.slane %v647, 5
      %v793 = vrot.slane %v792, 4
      %v794 = vrot.slane %v226, 5
      %v795 = vsel %vm700, %v793, %v794
      %v796 = vrot.slane %v794, 4
      %v797 = vrot.slane %v244, 5
      %v798 = vsel %vm700, %v796, %v797
      %v799 = vrot.slane %v648, 5
      %v800 = vrot.slane %v799, 4
      %v801 = vrot.slane %v228, 5
      %v802 = vsel %vm700, %v800, %v801
      %v803 = vrot.slane %v801, 4
      %v804 = vrot.slane %v245, 5
      %v805 = vsel %vm700, %v803, %v804
      %v806 = vrot.slane %v649, 5
      %v807 = vrot.slane %v806, 4
      %v808 = vrot.slane %v230, 5
      %v809 = vsel %vm700, %v807, %v808
      %v810 = vrot.slane %v808, 4
      %v811 = vrot.slane %v246, 5
      %v812 = vsel %vm700, %v810, %v811
      %s813 = sadd.s32 %s195, 1
      %s814 = smul.u32 %s813, 3
      %s815 = smul.addr %s814, 4
      %s816 = scalar_lea.vmem %s183, %s815
      %v817 = vld [vmem:[%s816] sm:$0xf]
      %v818 = vld [vmem:[%s816 + $0x4] sm:$0xf]
      %v819 = vld [vmem:[%s816 + $0xc] sm:$0xf]
      %v820 = vld [vmem:[%s816 + $0x10] sm:$0xf]
      %v821 = vld [vmem:[%s816 + $0x18] sm:$0xf]
      %v822 = vld [vmem:[%s816 + $0x1c] sm:$0xf]
      %v823 = vld [vmem:[%s816 + $0x24] sm:$0xf]
      %v824 = vld [vmem:[%s816 + $0x28] sm:$0xf]
      %v825 = vld [vmem:[%s816 + $0x30] sm:$0xf]
      %v826 = vld [vmem:[%s816 + $0x34] sm:$0xf]
      %v827 = vld [vmem:[%s816 + $0x3c] sm:$0xf]
      %v828 = vld [vmem:[%s816 + $0x40] sm:$0xf]
      %v829 = vld [vmem:[%s816 + $0x48] sm:$0xf]
      %v830 = vld [vmem:[%s816 + $0x4c] sm:$0xf]
      %v831 = vld [vmem:[%s816 + $0x54] sm:$0xf]
      %v832 = vld [vmem:[%s816 + $0x58] sm:$0xf]
      %v833 = vld [vmem:[%s816 + $0x60] sm:$0xf]
      %v834 = vld [vmem:[%s816 + $0x64] sm:$0xf]
      %v835 = vld [vmem:[%s816 + $0x6c] sm:$0xf]
      %v836 = vld [vmem:[%s816 + $0x70] sm:$0xf]
      %v837 = vld [vmem:[%s816 + $0x78] sm:$0xf]
      %v838 = vld [vmem:[%s816 + $0x7c] sm:$0xf]
      %v839 = vld [vmem:[%s816 + $0x84] sm:$0xf]
      %v840 = vld [vmem:[%s816 + $0x88] sm:$0xf]
      %v841 = vld [vmem:[%s816 + $0x90] sm:$0xf]
      %v842 = vld [vmem:[%s816 + $0x94] sm:$0xf]
      %v843 = vld [vmem:[%s816 + $0x9c] sm:$0xf]
      %v844 = vld [vmem:[%s816 + $0xa0] sm:$0xf]
      %v845 = vld [vmem:[%s816 + $0xa8] sm:$0xf]
      %v846 = vld [vmem:[%s816 + $0xac] sm:$0xf]
      %v847 = vld [vmem:[%s816 + $0xb4] sm:$0xf]
      %v848 = vld [vmem:[%s816 + $0xb8] sm:$0xf]
      %v849 = vld [vmem:[%s816 + $0x8] sm:$0x1]
      %v850 = vld [vmem:[%s816 + $0x14] sm:$0x1]
      %v851 = vld [vmem:[%s816 + $0x20] sm:$0x1]
      %v852 = vld [vmem:[%s816 + $0x2c] sm:$0x1]
      %v853 = vld [vmem:[%s816 + $0x38] sm:$0x1]
      %v854 = vld [vmem:[%s816 + $0x44] sm:$0x1]
      %v855 = vld [vmem:[%s816 + $0x50] sm:$0x1]
      %v856 = vld [vmem:[%s816 + $0x5c] sm:$0x1]
      %v857 = vld [vmem:[%s816 + $0x68] sm:$0x1]
      %v858 = vld [vmem:[%s816 + $0x74] sm:$0x1]
      %v859 = vld [vmem:[%s816 + $0x80] sm:$0x1]
      %v860 = vld [vmem:[%s816 + $0x8c] sm:$0x1]
      %v861 = vld [vmem:[%s816 + $0x98] sm:$0x1]
      %v862 = vld [vmem:[%s816 + $0xa4] sm:$0x1]
      %v863 = vld [vmem:[%s816 + $0xb0] sm:$0x1]
      %v864 = vld [vmem:[%s816 + $0xbc] sm:$0x1]
      %v866 = vshrl.u32 %v817, 16
      %v868 = vrot.slane %v866, 4
      %v869 = vshll.u32 %v817, 16
      %v871 = vrot.slane %v869, 5
      %v872 = vor.u32 %v868, %v871
      %v873 = vrot.slane %v872, 4
      %v875 = vshll.u32 %v818, 16
      %v877 = vrot.slane %v875, 5
      %v878 = vsel %vm249, %v873, %v877
      %v879 = vshrl.u32 %v818, 16
      %v881 = vrot.slane %v879, 4
      %v882 = vor.u32 %v881, %v877
      %v883 = vrot.slane %v882, 4
      %v885 = vshll.u32 %v849, 16
      %v887 = vrot.slane %v885, 5
      %v888 = vsel %vm249, %v883, %v887
      %v890 = vshrl.u32 %v819, 16
      %v892 = vrot.slane %v890, 4
      %v893 = vshll.u32 %v819, 16
      %v895 = vrot.slane %v893, 5
      %v896 = vor.u32 %v892, %v895
      %v897 = vrot.slane %v896, 4
      %v899 = vshll.u32 %v820, 16
      %v901 = vrot.slane %v899, 5
      %v902 = vsel %vm249, %v897, %v901
      %v903 = vshrl.u32 %v820, 16
      %v905 = vrot.slane %v903, 4
      %v906 = vor.u32 %v905, %v901
      %v907 = vrot.slane %v906, 4
      %v909 = vshll.u32 %v850, 16
      %v911 = vrot.slane %v909, 5
      %v912 = vsel %vm249, %v907, %v911
      %v914 = vshrl.u32 %v821, 16
      %v916 = vrot.slane %v914, 4
      %v917 = vshll.u32 %v821, 16
      %v919 = vrot.slane %v917, 5
      %v920 = vor.u32 %v916, %v919
      %v921 = vrot.slane %v920, 4
      %v923 = vshll.u32 %v822, 16
      %v925 = vrot.slane %v923, 5
      %v926 = vsel %vm249, %v921, %v925
      %v927 = vshrl.u32 %v822, 16
      %v929 = vrot.slane %v927, 4
      %v930 = vor.u32 %v929, %v925
      %v931 = vrot.slane %v930, 4
      %v933 = vshll.u32 %v851, 16
      %v935 = vrot.slane %v933, 5
      %v936 = vsel %vm249, %v931, %v935
      %v938 = vshrl.u32 %v823, 16
      %v940 = vrot.slane %v938, 4
      %v941 = vshll.u32 %v823, 16
      %v943 = vrot.slane %v941, 5
      %v944 = vor.u32 %v940, %v943
      %v945 = vrot.slane %v944, 4
      %v947 = vshll.u32 %v824, 16
      %v949 = vrot.slane %v947, 5
      %v950 = vsel %vm249, %v945, %v949
      %v951 = vshrl.u32 %v824, 16
      %v953 = vrot.slane %v951, 4
      %v954 = vor.u32 %v953, %v949
      %v955 = vrot.slane %v954, 4
      %v957 = vshll.u32 %v852, 16
      %v959 = vrot.slane %v957, 5
      %v960 = vsel %vm249, %v955, %v959
      %v962 = vshrl.u32 %v825, 16
      %v964 = vrot.slane %v962, 4
      %v965 = vshll.u32 %v825, 16
      %v967 = vrot.slane %v965, 5
      %v968 = vor.u32 %v964, %v967
      %v969 = vrot.slane %v968, 4
      %v971 = vshll.u32 %v826, 16
      %v973 = vrot.slane %v971, 5
      %v974 = vsel %vm249, %v969, %v973
      %v975 = vshrl.u32 %v826, 16
      %v977 = vrot.slane %v975, 4
      %v978 = vor.u32 %v977, %v973
      %v979 = vrot.slane %v978, 4
      %v981 = vshll.u32 %v853, 16
      %v983 = vrot.slane %v981, 5
      %v984 = vsel %vm249, %v979, %v983
      %v986 = vshrl.u32 %v827, 16
      %v988 = vrot.slane %v986, 4
      %v989 = vshll.u32 %v827, 16
      %v991 = vrot.slane %v989, 5
      %v992 = vor.u32 %v988, %v991
      %v993 = vrot.slane %v992, 4
      %v995 = vshll.u32 %v828, 16
      %v997 = vrot.slane %v995, 5
      %v998 = vsel %vm249, %v993, %v997
      %v999 = vshrl.u32 %v828, 16
      %v1001 = vrot.slane %v999, 4
      %v1002 = vor.u32 %v1001, %v997
      %v1003 = vrot.slane %v1002, 4
      %v1005 = vshll.u32 %v854, 16
      %v1007 = vrot.slane %v1005, 5
      %v1008 = vsel %vm249, %v1003, %v1007
      %v1010 = vshrl.u32 %v829, 16
      %v1012 = vrot.slane %v1010, 4
      %v1013 = vshll.u32 %v829, 16
      %v1015 = vrot.slane %v1013, 5
      %v1016 = vor.u32 %v1012, %v1015
      %v1017 = vrot.slane %v1016, 4
      %v1019 = vshll.u32 %v830, 16
      %v1021 = vrot.slane %v1019, 5
      %v1022 = vsel %vm249, %v1017, %v1021
      %v1023 = vshrl.u32 %v830, 16
      %v1025 = vrot.slane %v1023, 4
      %v1026 = vor.u32 %v1025, %v1021
      %v1027 = vrot.slane %v1026, 4
      %v1029 = vshll.u32 %v855, 16
      %v1031 = vrot.slane %v1029, 5
      %v1032 = vsel %vm249, %v1027, %v1031
      %v1034 = vshrl.u32 %v831, 16
      %v1036 = vrot.slane %v1034, 4
      %v1037 = vshll.u32 %v831, 16
      %v1039 = vrot.slane %v1037, 5
      %v1040 = vor.u32 %v1036, %v1039
      %v1041 = vrot.slane %v1040, 4
      %v1043 = vshll.u32 %v832, 16
      %v1045 = vrot.slane %v1043, 5
      %v1046 = vsel %vm249, %v1041, %v1045
      %v1047 = vshrl.u32 %v832, 16
      %v1049 = vrot.slane %v1047, 4
      %v1050 = vor.u32 %v1049, %v1045
      %v1051 = vrot.slane %v1050, 4
      %v1053 = vshll.u32 %v856, 16
      %v1055 = vrot.slane %v1053, 5
      %v1056 = vsel %vm249, %v1051, %v1055
      %v1058 = vshrl.u32 %v833, 16
      %v1060 = vrot.slane %v1058, 4
      %v1061 = vshll.u32 %v833, 16
      %v1063 = vrot.slane %v1061, 5
      %v1064 = vor.u32 %v1060, %v1063
      %v1065 = vrot.slane %v1064, 4
      %v1067 = vshll.u32 %v834, 16
      %v1069 = vrot.slane %v1067, 5
      %v1070 = vsel %vm249, %v1065, %v1069
      %v1071 = vshrl.u32 %v834, 16
      %v1073 = vrot.slane %v1071, 4
      %v1074 = vor.u32 %v1073, %v1069
      %v1075 = vrot.slane %v1074, 4
      %v1077 = vshll.u32 %v857, 16
      %v1079 = vrot.slane %v1077, 5
      %v1080 = vsel %vm249, %v1075, %v1079
      %v1082 = vshrl.u32 %v835, 16
      %v1084 = vrot.slane %v1082, 4
      %v1085 = vshll.u32 %v835, 16
      %v1087 = vrot.slane %v1085, 5
      %v1088 = vor.u32 %v1084, %v1087
      %v1089 = vrot.slane %v1088, 4
      %v1091 = vshll.u32 %v836, 16
      %v1093 = vrot.slane %v1091, 5
      %v1094 = vsel %vm249, %v1089, %v1093
      %v1095 = vshrl.u32 %v836, 16
      %v1097 = vrot.slane %v1095, 4
      %v1098 = vor.u32 %v1097, %v1093
      %v1099 = vrot.slane %v1098, 4
      %v1101 = vshll.u32 %v858, 16
      %v1103 = vrot.slane %v1101, 5
      %v1104 = vsel %vm249, %v1099, %v1103
      %v1106 = vshrl.u32 %v837, 16
      %v1108 = vrot.slane %v1106, 4
      %v1109 = vshll.u32 %v837, 16
      %v1111 = vrot.slane %v1109, 5
      %v1112 = vor.u32 %v1108, %v1111
      %v1113 = vrot.slane %v1112, 4
      %v1115 = vshll.u32 %v838, 16
      %v1117 = vrot.slane %v1115, 5
      %v1118 = vsel %vm249, %v1113, %v1117
      %v1119 = vshrl.u32 %v838, 16
      %v1121 = vrot.slane %v1119, 4
      %v1122 = vor.u32 %v1121, %v1117
      %v1123 = vrot.slane %v1122, 4
      %v1125 = vshll.u32 %v859, 16
      %v1127 = vrot.slane %v1125, 5
      %v1128 = vsel %vm249, %v1123, %v1127
      %v1130 = vshrl.u32 %v839, 16
      %v1132 = vrot.slane %v1130, 4
      %v1133 = vshll.u32 %v839, 16
      %v1135 = vrot.slane %v1133, 5
      %v1136 = vor.u32 %v1132, %v1135
      %v1137 = vrot.slane %v1136, 4
      %v1139 = vshll.u32 %v840, 16
      %v1141 = vrot.slane %v1139, 5
      %v1142 = vsel %vm249, %v1137, %v1141
      %v1143 = vshrl.u32 %v840, 16
      %v1145 = vrot.slane %v1143, 4
      %v1146 = vor.u32 %v1145, %v1141
      %v1147 = vrot.slane %v1146, 4
      %v1149 = vshll.u32 %v860, 16
      %v1151 = vrot.slane %v1149, 5
      %v1152 = vsel %vm249, %v1147, %v1151
      %v1154 = vshrl.u32 %v841, 16
      %v1156 = vrot.slane %v1154, 4
      %v1157 = vshll.u32 %v841, 16
      %v1159 = vrot.slane %v1157, 5
      %v1160 = vor.u32 %v1156, %v1159
      %v1161 = vrot.slane %v1160, 4
      %v1163 = vshll.u32 %v842, 16
      %v1165 = vrot.slane %v1163, 5
      %v1166 = vsel %vm249, %v1161, %v1165
      %v1167 = vshrl.u32 %v842, 16
      %v1169 = vrot.slane %v1167, 4
      %v1170 = vor.u32 %v1169, %v1165
      %v1171 = vrot.slane %v1170, 4
      %v1173 = vshll.u32 %v861, 16
      %v1175 = vrot.slane %v1173, 5
      %v1176 = vsel %vm249, %v1171, %v1175
      %v1178 = vshrl.u32 %v843, 16
      %v1180 = vrot.slane %v1178, 4
      %v1181 = vshll.u32 %v843, 16
      %v1183 = vrot.slane %v1181, 5
      %v1184 = vor.u32 %v1180, %v1183
      %v1185 = vrot.slane %v1184, 4
      %v1187 = vshll.u32 %v844, 16
      %v1189 = vrot.slane %v1187, 5
      %v1190 = vsel %vm249, %v1185, %v1189
      %v1191 = vshrl.u32 %v844, 16
      %v1193 = vrot.slane %v1191, 4
      %v1194 = vor.u32 %v1193, %v1189
      %v1195 = vrot.slane %v1194, 4
      %v1197 = vshll.u32 %v862, 16
      %v1199 = vrot.slane %v1197, 5
      %v1200 = vsel %vm249, %v1195, %v1199
      %v1202 = vshrl.u32 %v845, 16
      %v1204 = vrot.slane %v1202, 4
      %v1205 = vshll.u32 %v845, 16
      %v1207 = vrot.slane %v1205, 5
      %v1208 = vor.u32 %v1204, %v1207
      %v1209 = vrot.slane %v1208, 4
      %v1211 = vshll.u32 %v846, 16
      %v1213 = vrot.slane %v1211, 5
      %v1214 = vsel %vm249, %v1209, %v1213
      %v1215 = vshrl.u32 %v846, 16
      %v1217 = vrot.slane %v1215, 4
      %v1218 = vor.u32 %v1217, %v1213
      %v1219 = vrot.slane %v1218, 4
      %v1221 = vshll.u32 %v863, 16
      %v1223 = vrot.slane %v1221, 5
      %v1224 = vsel %vm249, %v1219, %v1223
      %v1226 = vshrl.u32 %v847, 16
      %v1228 = vrot.slane %v1226, 4
      %v1229 = vshll.u32 %v847, 16
      %v1231 = vrot.slane %v1229, 5
      %v1232 = vor.u32 %v1228, %v1231
      %v1233 = vrot.slane %v1232, 4
      %v1235 = vshll.u32 %v848, 16
      %v1237 = vrot.slane %v1235, 5
      %v1238 = vsel %vm249, %v1233, %v1237
      %v1239 = vshrl.u32 %v848, 16
      %v1241 = vrot.slane %v1239, 4
      %v1242 = vor.u32 %v1241, %v1237
      %v1243 = vrot.slane %v1242, 4
      %v1245 = vshll.u32 %v864, 16
      %v1247 = vrot.slane %v1245, 5
      %v1248 = vsel %vm249, %v1243, %v1247
      %v1249 = vld [vmem:[%s816] sm:$0xe]
      %v1250 = vld [vmem:[%s816 + $0xc] sm:$0xe]
      %v1251 = vld [vmem:[%s816 + $0x18] sm:$0xe]
      %v1252 = vld [vmem:[%s816 + $0x24] sm:$0xe]
      %v1253 = vld [vmem:[%s816 + $0x30] sm:$0xe]
      %v1254 = vld [vmem:[%s816 + $0x3c] sm:$0xe]
      %v1255 = vld [vmem:[%s816 + $0x48] sm:$0xe]
      %v1256 = vld [vmem:[%s816 + $0x54] sm:$0xe]
      %v1257 = vld [vmem:[%s816 + $0x60] sm:$0xe]
      %v1258 = vld [vmem:[%s816 + $0x6c] sm:$0xe]
      %v1259 = vld [vmem:[%s816 + $0x78] sm:$0xe]
      %v1260 = vld [vmem:[%s816 + $0x84] sm:$0xe]
      %v1261 = vld [vmem:[%s816 + $0x90] sm:$0xe]
      %v1262 = vld [vmem:[%s816 + $0x9c] sm:$0xe]
      %v1263 = vld [vmem:[%s816 + $0xa8] sm:$0xe]
      %v1264 = vld [vmem:[%s816 + $0xb4] sm:$0xe]
      %v1313 = vrot.slane %v1249, 5
      %v1314 = vrot.slane %v1313, 4
      %v1315 = vrot.slane %v818, 5
      %v1316 = vsel %vm700, %v1314, %v1315
      %v1317 = vrot.slane %v1315, 4
      %v1318 = vrot.slane %v849, 5
      %v1319 = vsel %vm700, %v1317, %v1318
      %v1320 = vrot.slane %v1250, 5
      %v1321 = vrot.slane %v1320, 4
      %v1322 = vrot.slane %v820, 5
      %v1323 = vsel %vm700, %v1321, %v1322
      %v1324 = vrot.slane %v1322, 4
      %v1325 = vrot.slane %v850, 5
      %v1326 = vsel %vm700, %v1324, %v1325
      %v1327 = vrot.slane %v1251, 5
      %v1328 = vrot.slane %v1327, 4
      %v1329 = vrot.slane %v822, 5
      %v1330 = vsel %vm700, %v1328, %v1329
      %v1331 = vrot.slane %v1329, 4
      %v1332 = vrot.slane %v851, 5
      %v1333 = vsel %vm700, %v1331, %v1332
      %v1334 = vrot.slane %v1252, 5
      %v1335 = vrot.slane %v1334, 4
      %v1336 = vrot.slane %v824, 5
      %v1337 = vsel %vm700, %v1335, %v1336
      %v1338 = vrot.slane %v1336, 4
      %v1339 = vrot.slane %v852, 5
      %v1340 = vsel %vm700, %v1338, %v1339
      %v1341 = vrot.slane %v1253, 5
      %v1342 = vrot.slane %v1341, 4
      %v1343 = vrot.slane %v826, 5
      %v1344 = vsel %vm700, %v1342, %v1343
      %v1345 = vrot.slane %v1343, 4
      %v1346 = vrot.slane %v853, 5
      %v1347 = vsel %vm700, %v1345, %v1346
      %v1348 = vrot.slane %v1254, 5
      %v1349 = vrot.slane %v1348, 4
      %v1350 = vrot.slane %v828, 5
      %v1351 = vsel %vm700, %v1349, %v1350
      %v1352 = vrot.slane %v1350, 4
      %v1353 = vrot.slane %v854, 5
      %v1354 = vsel %vm700, %v1352, %v1353
      %v1355 = vrot.slane %v1255, 5
      %v1356 = vrot.slane %v1355, 4
      %v1357 = vrot.slane %v830, 5
      %v1358 = vsel %vm700, %v1356, %v1357
      %v1359 = vrot.slane %v1357, 4
      %v1360 = vrot.slane %v855, 5
      %v1361 = vsel %vm700, %v1359, %v1360
      %v1362 = vrot.slane %v1256, 5
      %v1363 = vrot.slane %v1362, 4
      %v1364 = vrot.slane %v832, 5
      %v1365 = vsel %vm700, %v1363, %v1364
      %v1366 = vrot.slane %v1364, 4
      %v1367 = vrot.slane %v856, 5
      %v1368 = vsel %vm700, %v1366, %v1367
      %v1369 = vrot.slane %v1257, 5
      %v1370 = vrot.slane %v1369, 4
      %v1371 = vrot.slane %v834, 5
      %v1372 = vsel %vm700, %v1370, %v1371
      %v1373 = vrot.slane %v1371, 4
      %v1374 = vrot.slane %v857, 5
      %v1375 = vsel %vm700, %v1373, %v1374
      %v1376 = vrot.slane %v1258, 5
      %v1377 = vrot.slane %v1376, 4
      %v1378 = vrot.slane %v836, 5
      %v1379 = vsel %vm700, %v1377, %v1378
      %v1380 = vrot.slane %v1378, 4
      %v1381 = vrot.slane %v858, 5
      %v1382 = vsel %vm700, %v1380, %v1381
      %v1383 = vrot.slane %v1259, 5
      %v1384 = vrot.slane %v1383, 4
      %v1385 = vrot.slane %v838, 5
      %v1386 = vsel %vm700, %v1384, %v1385
      %v1387 = vrot.slane %v1385, 4
      %v1388 = vrot.slane %v859, 5
      %v1389 = vsel %vm700, %v1387, %v1388
      %v1390 = vrot.slane %v1260, 5
      %v1391 = vrot.slane %v1390, 4
      %v1392 = vrot.slane %v840, 5
      %v1393 = vsel %vm700, %v1391, %v1392
      %v1394 = vrot.slane %v1392, 4
      %v1395 = vrot.slane %v860, 5
      %v1396 = vsel %vm700, %v1394, %v1395
      %v1397 = vrot.slane %v1261, 5
      %v1398 = vrot.slane %v1397, 4
      %v1399 = vrot.slane %v842, 5
      %v1400 = vsel %vm700, %v1398, %v1399
      %v1401 = vrot.slane %v1399, 4
      %v1402 = vrot.slane %v861, 5
      %v1403 = vsel %vm700, %v1401, %v1402
      %v1404 = vrot.slane %v1262, 5
      %v1405 = vrot.slane %v1404, 4
      %v1406 = vrot.slane %v844, 5
      %v1407 = vsel %vm700, %v1405, %v1406
      %v1408 = vrot.slane %v1406, 4
      %v1409 = vrot.slane %v862, 5
      %v1410 = vsel %vm700, %v1408, %v1409
      %v1411 = vrot.slane %v1263, 5
      %v1412 = vrot.slane %v1411, 4
      %v1413 = vrot.slane %v846, 5
      %v1414 = vsel %vm700, %v1412, %v1413
      %v1415 = vrot.slane %v1413, 4
      %v1416 = vrot.slane %v863, 5
      %v1417 = vsel %vm700, %v1415, %v1416
      %v1418 = vrot.slane %v1264, 5
      %v1419 = vrot.slane %v1418, 4
      %v1420 = vrot.slane %v848, 5
      %v1421 = vsel %vm700, %v1419, %v1420
      %v1422 = vrot.slane %v1420, 4
      %v1423 = vrot.slane %v864, 5
      %v1424 = vsel %vm700, %v1422, %v1423
      %s1425 = sadd.s32 %s195, 2
      %s1426 = smul.u32 %s1425, 3
      %s1427 = smul.addr %s1426, 4
      %s1428 = scalar_lea.vmem %s183, %s1427
      %v1429 = vld [vmem:[%s1428] sm:$0xf]
      %v1430 = vld [vmem:[%s1428 + $0x4] sm:$0xf]
      %v1431 = vld [vmem:[%s1428 + $0xc] sm:$0xf]
      %v1432 = vld [vmem:[%s1428 + $0x10] sm:$0xf]
      %v1433 = vld [vmem:[%s1428 + $0x18] sm:$0xf]
      %v1434 = vld [vmem:[%s1428 + $0x1c] sm:$0xf]
      %v1435 = vld [vmem:[%s1428 + $0x24] sm:$0xf]
      %v1436 = vld [vmem:[%s1428 + $0x28] sm:$0xf]
      %v1437 = vld [vmem:[%s1428 + $0x30] sm:$0xf]
      %v1438 = vld [vmem:[%s1428 + $0x34] sm:$0xf]
      %v1439 = vld [vmem:[%s1428 + $0x3c] sm:$0xf]
      %v1440 = vld [vmem:[%s1428 + $0x40] sm:$0xf]
      %v1441 = vld [vmem:[%s1428 + $0x48] sm:$0xf]
      %v1442 = vld [vmem:[%s1428 + $0x4c] sm:$0xf]
      %v1443 = vld [vmem:[%s1428 + $0x54] sm:$0xf]
      %v1444 = vld [vmem:[%s1428 + $0x58] sm:$0xf]
      %v1445 = vld [vmem:[%s1428 + $0x60] sm:$0xf]
      %v1446 = vld [vmem:[%s1428 + $0x64] sm:$0xf]
      %v1447 = vld [vmem:[%s1428 + $0x6c] sm:$0xf]
      %v1448 = vld [vmem:[%s1428 + $0x70] sm:$0xf]
      %v1449 = vld [vmem:[%s1428 + $0x78] sm:$0xf]
      %v1450 = vld [vmem:[%s1428 + $0x7c] sm:$0xf]
      %v1451 = vld [vmem:[%s1428 + $0x84] sm:$0xf]
      %v1452 = vld [vmem:[%s1428 + $0x88] sm:$0xf]
      %v1453 = vld [vmem:[%s1428 + $0x90] sm:$0xf]
      %v1454 = vld [vmem:[%s1428 + $0x94] sm:$0xf]
      %v1455 = vld [vmem:[%s1428 + $0x9c] sm:$0xf]
      %v1456 = vld [vmem:[%s1428 + $0xa0] sm:$0xf]
      %v1457 = vld [vmem:[%s1428 + $0xa8] sm:$0xf]
      %v1458 = vld [vmem:[%s1428 + $0xac] sm:$0xf]
      %v1459 = vld [vmem:[%s1428 + $0xb4] sm:$0xf]
      %v1460 = vld [vmem:[%s1428 + $0xb8] sm:$0xf]
      %v1461 = vld [vmem:[%s1428 + $0x8] sm:$0x1]
      %v1462 = vld [vmem:[%s1428 + $0x14] sm:$0x1]
      %v1463 = vld [vmem:[%s1428 + $0x20] sm:$0x1]
      %v1464 = vld [vmem:[%s1428 + $0x2c] sm:$0x1]
      %v1465 = vld [vmem:[%s1428 + $0x38] sm:$0x1]
      %v1466 = vld [vmem:[%s1428 + $0x44] sm:$0x1]
      %v1467 = vld [vmem:[%s1428 + $0x50] sm:$0x1]
      %v1468 = vld [vmem:[%s1428 + $0x5c] sm:$0x1]
      %v1469 = vld [vmem:[%s1428 + $0x68] sm:$0x1]
      %v1470 = vld [vmem:[%s1428 + $0x74] sm:$0x1]
      %v1471 = vld [vmem:[%s1428 + $0x80] sm:$0x1]
      %v1472 = vld [vmem:[%s1428 + $0x8c] sm:$0x1]
      %v1473 = vld [vmem:[%s1428 + $0x98] sm:$0x1]
      %v1474 = vld [vmem:[%s1428 + $0xa4] sm:$0x1]
      %v1475 = vld [vmem:[%s1428 + $0xb0] sm:$0x1]
      %v1476 = vld [vmem:[%s1428 + $0xbc] sm:$0x1]
      %v1478 = vshrl.u32 %v1429, 16
      %v1480 = vrot.slane %v1478, 4
      %v1481 = vshll.u32 %v1429, 16
      %v1483 = vrot.slane %v1481, 5
      %v1484 = vor.u32 %v1480, %v1483
      %v1485 = vrot.slane %v1484, 4
      %v1487 = vshll.u32 %v1430, 16
      %v1489 = vrot.slane %v1487, 5
      %v1490 = vsel %vm249, %v1485, %v1489
      %v1491 = vshrl.u32 %v1430, 16
      %v1493 = vrot.slane %v1491, 4
      %v1494 = vor.u32 %v1493, %v1489
      %v1495 = vrot.slane %v1494, 4
      %v1497 = vshll.u32 %v1461, 16
      %v1499 = vrot.slane %v1497, 5
      %v1500 = vsel %vm249, %v1495, %v1499
      %v1502 = vshrl.u32 %v1431, 16
      %v1504 = vrot.slane %v1502, 4
      %v1505 = vshll.u32 %v1431, 16
      %v1507 = vrot.slane %v1505, 5
      %v1508 = vor.u32 %v1504, %v1507
      %v1509 = vrot.slane %v1508, 4
      %v1511 = vshll.u32 %v1432, 16
      %v1513 = vrot.slane %v1511, 5
      %v1514 = vsel %vm249, %v1509, %v1513
      %v1515 = vshrl.u32 %v1432, 16
      %v1517 = vrot.slane %v1515, 4
      %v1518 = vor.u32 %v1517, %v1513
      %v1519 = vrot.slane %v1518, 4
      %v1521 = vshll.u32 %v1462, 16
      %v1523 = vrot.slane %v1521, 5
      %v1524 = vsel %vm249, %v1519, %v1523
      %v1526 = vshrl.u32 %v1433, 16
      %v1528 = vrot.slane %v1526, 4
      %v1529 = vshll.u32 %v1433, 16
      %v1531 = vrot.slane %v1529, 5
      %v1532 = vor.u32 %v1528, %v1531
      %v1533 = vrot.slane %v1532, 4
      %v1535 = vshll.u32 %v1434, 16
      %v1537 = vrot.slane %v1535, 5
      %v1538 = vsel %vm249, %v1533, %v1537
      %v1539 = vshrl.u32 %v1434, 16
      %v1541 = vrot.slane %v1539, 4
      %v1542 = vor.u32 %v1541, %v1537
      %v1543 = vrot.slane %v1542, 4
      %v1545 = vshll.u32 %v1463, 16
      %v1547 = vrot.slane %v1545, 5
      %v1548 = vsel %vm249, %v1543, %v1547
      %v1550 = vshrl.u32 %v1435, 16
      %v1552 = vrot.slane %v1550, 4
      %v1553 = vshll.u32 %v1435, 16
      %v1555 = vrot.slane %v1553, 5
      %v1556 = vor.u32 %v1552, %v1555
      %v1557 = vrot.slane %v1556, 4
      %v1559 = vshll.u32 %v1436, 16
      %v1561 = vrot.slane %v1559, 5
      %v1562 = vsel %vm249, %v1557, %v1561
      %v1563 = vshrl.u32 %v1436, 16
      %v1565 = vrot.slane %v1563, 4
      %v1566 = vor.u32 %v1565, %v1561
      %v1567 = vrot.slane %v1566, 4
      %v1569 = vshll.u32 %v1464, 16
      %v1571 = vrot.slane %v1569, 5
      %v1572 = vsel %vm249, %v1567, %v1571
      %v1574 = vshrl.u32 %v1437, 16
      %v1576 = vrot.slane %v1574, 4
      %v1577 = vshll.u32 %v1437, 16
      %v1579 = vrot.slane %v1577, 5
      %v1580 = vor.u32 %v1576, %v1579
      %v1581 = vrot.slane %v1580, 4
      %v1583 = vshll.u32 %v1438, 16
      %v1585 = vrot.slane %v1583, 5
      %v1586 = vsel %vm249, %v1581, %v1585
      %v1587 = vshrl.u32 %v1438, 16
      %v1589 = vrot.slane %v1587, 4
      %v1590 = vor.u32 %v1589, %v1585
      %v1591 = vrot.slane %v1590, 4
      %v1593 = vshll.u32 %v1465, 16
      %v1595 = vrot.slane %v1593, 5
      %v1596 = vsel %vm249, %v1591, %v1595
      %v1598 = vshrl.u32 %v1439, 16
      %v1600 = vrot.slane %v1598, 4
      %v1601 = vshll.u32 %v1439, 16
      %v1603 = vrot.slane %v1601, 5
      %v1604 = vor.u32 %v1600, %v1603
      %v1605 = vrot.slane %v1604, 4
      %v1607 = vshll.u32 %v1440, 16
      %v1609 = vrot.slane %v1607, 5
      %v1610 = vsel %vm249, %v1605, %v1609
      %v1611 = vshrl.u32 %v1440, 16
      %v1613 = vrot.slane %v1611, 4
      %v1614 = vor.u32 %v1613, %v1609
      %v1615 = vrot.slane %v1614, 4
      %v1617 = vshll.u32 %v1466, 16
      %v1619 = vrot.slane %v1617, 5
      %v1620 = vsel %vm249, %v1615, %v1619
      %v1622 = vshrl.u32 %v1441, 16
      %v1624 = vrot.slane %v1622, 4
      %v1625 = vshll.u32 %v1441, 16
      %v1627 = vrot.slane %v1625, 5
      %v1628 = vor.u32 %v1624, %v1627
      %v1629 = vrot.slane %v1628, 4
      %v1631 = vshll.u32 %v1442, 16
      %v1633 = vrot.slane %v1631, 5
      %v1634 = vsel %vm249, %v1629, %v1633
      %v1635 = vshrl.u32 %v1442, 16
      %v1637 = vrot.slane %v1635, 4
      %v1638 = vor.u32 %v1637, %v1633
      %v1639 = vrot.slane %v1638, 4
      %v1641 = vshll.u32 %v1467, 16
      %v1643 = vrot.slane %v1641, 5
      %v1644 = vsel %vm249, %v1639, %v1643
      %v1646 = vshrl.u32 %v1443, 16
      %v1648 = vrot.slane %v1646, 4
      %v1649 = vshll.u32 %v1443, 16
      %v1651 = vrot.slane %v1649, 5
      %v1652 = vor.u32 %v1648, %v1651
      %v1653 = vrot.slane %v1652, 4
      %v1655 = vshll.u32 %v1444, 16
      %v1657 = vrot.slane %v1655, 5
      %v1658 = vsel %vm249, %v1653, %v1657
      %v1659 = vshrl.u32 %v1444, 16
      %v1661 = vrot.slane %v1659, 4
      %v1662 = vor.u32 %v1661, %v1657
      %v1663 = vrot.slane %v1662, 4
      %v1665 = vshll.u32 %v1468, 16
      %v1667 = vrot.slane %v1665, 5
      %v1668 = vsel %vm249, %v1663, %v1667
      %v1670 = vshrl.u32 %v1445, 16
      %v1672 = vrot.slane %v1670, 4
      %v1673 = vshll.u32 %v1445, 16
      %v1675 = vrot.slane %v1673, 5
      %v1676 = vor.u32 %v1672, %v1675
      %v1677 = vrot.slane %v1676, 4
      %v1679 = vshll.u32 %v1446, 16
      %v1681 = vrot.slane %v1679, 5
      %v1682 = vsel %vm249, %v1677, %v1681
      %v1683 = vshrl.u32 %v1446, 16
      %v1685 = vrot.slane %v1683, 4
      %v1686 = vor.u32 %v1685, %v1681
      %v1687 = vrot.slane %v1686, 4
      %v1689 = vshll.u32 %v1469, 16
      %v1691 = vrot.slane %v1689, 5
      %v1692 = vsel %vm249, %v1687, %v1691
      %v1694 = vshrl.u32 %v1447, 16
      %v1696 = vrot.slane %v1694, 4
      %v1697 = vshll.u32 %v1447, 16
      %v1699 = vrot.slane %v1697, 5
      %v1700 = vor.u32 %v1696, %v1699
      %v1701 = vrot.slane %v1700, 4
      %v1703 = vshll.u32 %v1448, 16
      %v1705 = vrot.slane %v1703, 5
      %v1706 = vsel %vm249, %v1701, %v1705
      %v1707 = vshrl.u32 %v1448, 16
      %v1709 = vrot.slane %v1707, 4
      %v1710 = vor.u32 %v1709, %v1705
      %v1711 = vrot.slane %v1710, 4
      %v1713 = vshll.u32 %v1470, 16
      %v1715 = vrot.slane %v1713, 5
      %v1716 = vsel %vm249, %v1711, %v1715
      %v1718 = vshrl.u32 %v1449, 16
      %v1720 = vrot.slane %v1718, 4
      %v1721 = vshll.u32 %v1449, 16
      %v1723 = vrot.slane %v1721, 5
      %v1724 = vor.u32 %v1720, %v1723
      %v1725 = vrot.slane %v1724, 4
      %v1727 = vshll.u32 %v1450, 16
      %v1729 = vrot.slane %v1727, 5
      %v1730 = vsel %vm249, %v1725, %v1729
      %v1731 = vshrl.u32 %v1450, 16
      %v1733 = vrot.slane %v1731, 4
      %v1734 = vor.u32 %v1733, %v1729
      %v1735 = vrot.slane %v1734, 4
      %v1737 = vshll.u32 %v1471, 16
      %v1739 = vrot.slane %v1737, 5
      %v1740 = vsel %vm249, %v1735, %v1739
      %v1742 = vshrl.u32 %v1451, 16
      %v1744 = vrot.slane %v1742, 4
      %v1745 = vshll.u32 %v1451, 16
      %v1747 = vrot.slane %v1745, 5
      %v1748 = vor.u32 %v1744, %v1747
      %v1749 = vrot.slane %v1748, 4
      %v1751 = vshll.u32 %v1452, 16
      %v1753 = vrot.slane %v1751, 5
      %v1754 = vsel %vm249, %v1749, %v1753
      %v1755 = vshrl.u32 %v1452, 16
      %v1757 = vrot.slane %v1755, 4
      %v1758 = vor.u32 %v1757, %v1753
      %v1759 = vrot.slane %v1758, 4
      %v1761 = vshll.u32 %v1472, 16
      %v1763 = vrot.slane %v1761, 5
      %v1764 = vsel %vm249, %v1759, %v1763
      %v1766 = vshrl.u32 %v1453, 16
      %v1768 = vrot.slane %v1766, 4
      %v1769 = vshll.u32 %v1453, 16
      %v1771 = vrot.slane %v1769, 5
      %v1772 = vor.u32 %v1768, %v1771
      %v1773 = vrot.slane %v1772, 4
      %v1775 = vshll.u32 %v1454, 16
      %v1777 = vrot.slane %v1775, 5
      %v1778 = vsel %vm249, %v1773, %v1777
      %v1779 = vshrl.u32 %v1454, 16
      %v1781 = vrot.slane %v1779, 4
      %v1782 = vor.u32 %v1781, %v1777
      %v1783 = vrot.slane %v1782, 4
      %v1785 = vshll.u32 %v1473, 16
      %v1787 = vrot.slane %v1785, 5
      %v1788 = vsel %vm249, %v1783, %v1787
      %v1790 = vshrl.u32 %v1455, 16
      %v1792 = vrot.slane %v1790, 4
      %v1793 = vshll.u32 %v1455, 16
      %v1795 = vrot.slane %v1793, 5
      %v1796 = vor.u32 %v1792, %v1795
      %v1797 = vrot.slane %v1796, 4
      %v1799 = vshll.u32 %v1456, 16
      %v1801 = vrot.slane %v1799, 5
      %v1802 = vsel %vm249, %v1797, %v1801
      %v1803 = vshrl.u32 %v1456, 16
      %v1805 = vrot.slane %v1803, 4
      %v1806 = vor.u32 %v1805, %v1801
      %v1807 = vrot.slane %v1806, 4
      %v1809 = vshll.u32 %v1474, 16
      %v1811 = vrot.slane %v1809, 5
      %v1812 = vsel %vm249, %v1807, %v1811
      %v1814 = vshrl.u32 %v1457, 16
      %v1816 = vrot.slane %v1814, 4
      %v1817 = vshll.u32 %v1457, 16
      %v1819 = vrot.slane %v1817, 5
      %v1820 = vor.u32 %v1816, %v1819
      %v1821 = vrot.slane %v1820, 4
      %v1823 = vshll.u32 %v1458, 16
      %v1825 = vrot.slane %v1823, 5
      %v1826 = vsel %vm249, %v1821, %v1825
      %v1827 = vshrl.u32 %v1458, 16
      %v1829 = vrot.slane %v1827, 4
      %v1830 = vor.u32 %v1829, %v1825
      %v1831 = vrot.slane %v1830, 4
      %v1833 = vshll.u32 %v1475, 16
      %v1835 = vrot.slane %v1833, 5
      %v1836 = vsel %vm249, %v1831, %v1835
      %v1838 = vshrl.u32 %v1459, 16
      %v1840 = vrot.slane %v1838, 4
      %v1841 = vshll.u32 %v1459, 16
      %v1843 = vrot.slane %v1841, 5
      %v1844 = vor.u32 %v1840, %v1843
      %v1845 = vrot.slane %v1844, 4
      %v1847 = vshll.u32 %v1460, 16
      %v1849 = vrot.slane %v1847, 5
      %v1850 = vsel %vm249, %v1845, %v1849
      %v1851 = vshrl.u32 %v1460, 16
      %v1853 = vrot.slane %v1851, 4
      %v1854 = vor.u32 %v1853, %v1849
      %v1855 = vrot.slane %v1854, 4
      %v1857 = vshll.u32 %v1476, 16
      %v1859 = vrot.slane %v1857, 5
      %v1860 = vsel %vm249, %v1855, %v1859
      %v1861 = vld [vmem:[%s1428] sm:$0xe]
      %v1862 = vld [vmem:[%s1428 + $0xc] sm:$0xe]
      %v1863 = vld [vmem:[%s1428 + $0x18] sm:$0xe]
      %v1864 = vld [vmem:[%s1428 + $0x24] sm:$0xe]
      %v1865 = vld [vmem:[%s1428 + $0x30] sm:$0xe]
      %v1866 = vld [vmem:[%s1428 + $0x3c] sm:$0xe]
      %v1867 = vld [vmem:[%s1428 + $0x48] sm:$0xe]
      %v1868 = vld [vmem:[%s1428 + $0x54] sm:$0xe]
      %v1869 = vld [vmem:[%s1428 + $0x60] sm:$0xe]
      %v1870 = vld [vmem:[%s1428 + $0x6c] sm:$0xe]
      %v1871 = vld [vmem:[%s1428 + $0x78] sm:$0xe]
      %v1872 = vld [vmem:[%s1428 + $0x84] sm:$0xe]
      %v1873 = vld [vmem:[%s1428 + $0x90] sm:$0xe]
      %v1874 = vld [vmem:[%s1428 + $0x9c] sm:$0xe]
      %v1875 = vld [vmem:[%s1428 + $0xa8] sm:$0xe]
      %v1876 = vld [vmem:[%s1428 + $0xb4] sm:$0xe]
      %v1925 = vrot.slane %v1861, 5
      %v1926 = vrot.slane %v1925, 4
      %v1927 = vrot.slane %v1430, 5
      %v1928 = vsel %vm700, %v1926, %v1927
      %v1929 = vrot.slane %v1927, 4
      %v1930 = vrot.slane %v1461, 5
      %v1931 = vsel %vm700, %v1929, %v1930
      %v1932 = vrot.slane %v1862, 5
      %v1933 = vrot.slane %v1932, 4
      %v1934 = vrot.slane %v1432, 5
      %v1935 = vsel %vm700, %v1933, %v1934
      %v1936 = vrot.slane %v1934, 4
      %v1937 = vrot.slane %v1462, 5
      %v1938 = vsel %vm700, %v1936, %v1937
      %v1939 = vrot.slane %v1863, 5
      %v1940 = vrot.slane %v1939, 4
      %v1941 = vrot.slane %v1434, 5
      %v1942 = vsel %vm700, %v1940, %v1941
      %v1943 = vrot.slane %v1941, 4
      %v1944 = vrot.slane %v1463, 5
      %v1945 = vsel %vm700, %v1943, %v1944
      %v1946 = vrot.slane %v1864, 5
      %v1947 = vrot.slane %v1946, 4
      %v1948 = vrot.slane %v1436, 5
      %v1949 = vsel %vm700, %v1947, %v1948
      %v1950 = vrot.slane %v1948, 4
      %v1951 = vrot.slane %v1464, 5
      %v1952 = vsel %vm700, %v1950, %v1951
      %v1953 = vrot.slane %v1865, 5
      %v1954 = vrot.slane %v1953, 4
      %v1955 = vrot.slane %v1438, 5
      %v1956 = vsel %vm700, %v1954, %v1955
      %v1957 = vrot.slane %v1955, 4
      %v1958 = vrot.slane %v1465, 5
      %v1959 = vsel %vm700, %v1957, %v1958
      %v1960 = vrot.slane %v1866, 5
      %v1961 = vrot.slane %v1960, 4
      %v1962 = vrot.slane %v1440, 5
      %v1963 = vsel %vm700, %v1961, %v1962
      %v1964 = vrot.slane %v1962, 4
      %v1965 = vrot.slane %v1466, 5
      %v1966 = vsel %vm700, %v1964, %v1965
      %v1967 = vrot.slane %v1867, 5
      %v1968 = vrot.slane %v1967, 4
      %v1969 = vrot.slane %v1442, 5
      %v1970 = vsel %vm700, %v1968, %v1969
      %v1971 = vrot.slane %v1969, 4
      %v1972 = vrot.slane %v1467, 5
      %v1973 = vsel %vm700, %v1971, %v1972
      %v1974 = vrot.slane %v1868, 5
      %v1975 = vrot.slane %v1974, 4
      %v1976 = vrot.slane %v1444, 5
      %v1977 = vsel %vm700, %v1975, %v1976
      %v1978 = vrot.slane %v1976, 4
      %v1979 = vrot.slane %v1468, 5
      %v1980 = vsel %vm700, %v1978, %v1979
      %v1981 = vrot.slane %v1869, 5
      %v1982 = vrot.slane %v1981, 4
      %v1983 = vrot.slane %v1446, 5
      %v1984 = vsel %vm700, %v1982, %v1983
      %v1985 = vrot.slane %v1983, 4
      %v1986 = vrot.slane %v1469, 5
      %v1987 = vsel %vm700, %v1985, %v1986
      %v1988 = vrot.slane %v1870, 5
      %v1989 = vrot.slane %v1988, 4
      %v1990 = vrot.slane %v1448, 5
      %v1991 = vsel %vm700, %v1989, %v1990
      %v1992 = vrot.slane %v1990, 4
      %v1993 = vrot.slane %v1470, 5
      %v1994 = vsel %vm700, %v1992, %v1993
      %v1995 = vrot.slane %v1871, 5
      %v1996 = vrot.slane %v1995, 4
      %v1997 = vrot.slane %v1450, 5
      %v1998 = vsel %vm700, %v1996, %v1997
      %v1999 = vrot.slane %v1997, 4
      %v2000 = vrot.slane %v1471, 5
      %v2001 = vsel %vm700, %v1999, %v2000
      %v2002 = vrot.slane %v1872, 5
      %v2003 = vrot.slane %v2002, 4
      %v2004 = vrot.slane %v1452, 5
      %v2005 = vsel %vm700, %v2003, %v2004
      %v2006 = vrot.slane %v2004, 4
      %v2007 = vrot.slane %v1472, 5
      %v2008 = vsel %vm700, %v2006, %v2007
      %v2009 = vrot.slane %v1873, 5
      %v2010 = vrot.slane %v2009, 4
      %v2011 = vrot.slane %v1454, 5
      %v2012 = vsel %vm700, %v2010, %v2011
      %v2013 = vrot.slane %v2011, 4
      %v2014 = vrot.slane %v1473, 5
      %v2015 = vsel %vm700, %v2013, %v2014
      %v2016 = vrot.slane %v1874, 5
      %v2017 = vrot.slane %v2016, 4
      %v2018 = vrot.slane %v1456, 5
      %v2019 = vsel %vm700, %v2017, %v2018
      %v2020 = vrot.slane %v2018, 4
      %v2021 = vrot.slane %v1474, 5
      %v2022 = vsel %vm700, %v2020, %v2021
      %v2023 = vrot.slane %v1875, 5
      %v2024 = vrot.slane %v2023, 4
      %v2025 = vrot.slane %v1458, 5
      %v2026 = vsel %vm700, %v2024, %v2025
      %v2027 = vrot.slane %v2025, 4
      %v2028 = vrot.slane %v1475, 5
      %v2029 = vsel %vm700, %v2027, %v2028
      %v2030 = vrot.slane %v1876, 5
      %v2031 = vrot.slane %v2030, 4
      %v2032 = vrot.slane %v1460, 5
      %v2033 = vsel %vm700, %v2031, %v2032
      %v2034 = vrot.slane %v2032, 4
      %v2035 = vrot.slane %v1476, 5
      %v2036 = vsel %vm700, %v2034, %v2035
      %v2053 = vunpack.c.l.b16 %v199
      %v2054 = vunpack.c.l.b16 %v200
      %v2055 = vunpack.c.l.b16 %v201
      %v2056 = vunpack.c.l.b16 %v202
      %v2057 = vunpack.c.l.b16 %v203
      %v2058 = vunpack.c.l.b16 %v204
      %v2059 = vunpack.c.l.b16 %v205
      %v2060 = vunpack.c.l.b16 %v206
      %v2061 = vunpack.c.l.b16 %v207
      %v2062 = vunpack.c.l.b16 %v208
      %v2063 = vunpack.c.l.b16 %v209
      %v2064 = vunpack.c.l.b16 %v210
      %v2065 = vunpack.c.l.b16 %v211
      %v2066 = vunpack.c.l.b16 %v212
      %v2067 = vunpack.c.l.b16 %v213
      %v2068 = vunpack.c.l.b16 %v214
      %v2069 = vunpack.c.l.b16 %v215
      %v2070 = vunpack.c.l.b16 %v216
      %v2071 = vunpack.c.l.b16 %v217
      %v2072 = vunpack.c.l.b16 %v218
      %v2073 = vunpack.c.l.b16 %v219
      %v2074 = vunpack.c.l.b16 %v220
      %v2075 = vunpack.c.l.b16 %v221
      %v2076 = vunpack.c.l.b16 %v222
      %v2077 = vunpack.c.l.b16 %v223
      %v2078 = vunpack.c.l.b16 %v224
      %v2079 = vunpack.c.l.b16 %v225
      %v2080 = vunpack.c.l.b16 %v226
      %v2081 = vunpack.c.l.b16 %v227
      %v2082 = vunpack.c.l.b16 %v228
      %v2083 = vunpack.c.l.b16 %v229
      %v2084 = vunpack.c.l.b16 %v230
      %v2085 = vpack.c.b16 %v2054, %v2053
      %v2086 = vpack.c.b16 %v2056, %v2055
      %v2087 = vpack.c.b16 %v2058, %v2057
      %v2088 = vpack.c.b16 %v2060, %v2059
      %v2089 = vpack.c.b16 %v2062, %v2061
      %v2090 = vpack.c.b16 %v2064, %v2063
      %v2091 = vpack.c.b16 %v2066, %v2065
      %v2092 = vpack.c.b16 %v2068, %v2067
      %v2093 = vpack.c.b16 %v2070, %v2069
      %v2094 = vpack.c.b16 %v2072, %v2071
      %v2095 = vpack.c.b16 %v2074, %v2073
      %v2096 = vpack.c.b16 %v2076, %v2075
      %v2097 = vpack.c.b16 %v2078, %v2077
      %v2098 = vpack.c.b16 %v2080, %v2079
      %v2099 = vpack.c.b16 %v2082, %v2081
      %v2100 = vpack.c.b16 %v2084, %v2083
      %v2101 = vunpack.c.l.b16 %v263
      %v2102 = vunpack.c.l.b16 %v273
      %v2103 = vunpack.c.l.b16 %v287
      %v2104 = vunpack.c.l.b16 %v297
      %v2105 = vunpack.c.l.b16 %v311
      %v2106 = vunpack.c.l.b16 %v321
      %v2107 = vunpack.c.l.b16 %v335
      %v2108 = vunpack.c.l.b16 %v345
      %v2109 = vunpack.c.l.b16 %v359
      %v2110 = vunpack.c.l.b16 %v369
      %v2111 = vunpack.c.l.b16 %v383
      %v2112 = vunpack.c.l.b16 %v393
      %v2113 = vunpack.c.l.b16 %v407
      %v2114 = vunpack.c.l.b16 %v417
      %v2115 = vunpack.c.l.b16 %v431
      %v2116 = vunpack.c.l.b16 %v441
      %v2117 = vunpack.c.l.b16 %v455
      %v2118 = vunpack.c.l.b16 %v465
      %v2119 = vunpack.c.l.b16 %v479
      %v2120 = vunpack.c.l.b16 %v489
      %v2121 = vunpack.c.l.b16 %v503
      %v2122 = vunpack.c.l.b16 %v513
      %v2123 = vunpack.c.l.b16 %v527
      %v2124 = vunpack.c.l.b16 %v537
      %v2125 = vunpack.c.l.b16 %v551
      %v2126 = vunpack.c.l.b16 %v561
      %v2127 = vunpack.c.l.b16 %v575
      %v2128 = vunpack.c.l.b16 %v585
      %v2129 = vunpack.c.l.b16 %v599
      %v2130 = vunpack.c.l.b16 %v609
      %v2131 = vunpack.c.l.b16 %v623
      %v2132 = vunpack.c.l.b16 %v633
      %v2133 = vpack.c.b16 %v2102, %v2101
      %v2134 = vpack.c.b16 %v2104, %v2103
      %v2135 = vpack.c.b16 %v2106, %v2105
      %v2136 = vpack.c.b16 %v2108, %v2107
      %v2137 = vpack.c.b16 %v2110, %v2109
      %v2138 = vpack.c.b16 %v2112, %v2111
      %v2139 = vpack.c.b16 %v2114, %v2113
      %v2140 = vpack.c.b16 %v2116, %v2115
      %v2141 = vpack.c.b16 %v2118, %v2117
      %v2142 = vpack.c.b16 %v2120, %v2119
      %v2143 = vpack.c.b16 %v2122, %v2121
      %v2144 = vpack.c.b16 %v2124, %v2123
      %v2145 = vpack.c.b16 %v2126, %v2125
      %v2146 = vpack.c.b16 %v2128, %v2127
      %v2147 = vpack.c.b16 %v2130, %v2129
      %v2148 = vpack.c.b16 %v2132, %v2131
      %2149 = vrot.lane.b32.xlu0 %v2133, 8
      %v2150 = vpop.permute.xlu0 %2149
      %2151 = vrot.lane.b32.xlu0 %v2134, 8
      %v2152 = vpop.permute.xlu0 %2151
      %2153 = vrot.lane.b32.xlu0 %v2135, 8
      %v2154 = vpop.permute.xlu0 %2153
      %2155 = vrot.lane.b32.xlu0 %v2136, 8
      %v2156 = vpop.permute.xlu0 %2155
      %2157 = vrot.lane.b32.xlu0 %v2137, 8
      %v2158 = vpop.permute.xlu0 %2157
      %2159 = vrot.lane.b32.xlu0 %v2138, 8
      %v2160 = vpop.permute.xlu0 %2159
      %2161 = vrot.lane.b32.xlu0 %v2139, 8
      %v2162 = vpop.permute.xlu0 %2161
      %2163 = vrot.lane.b32.xlu0 %v2140, 8
      %v2164 = vpop.permute.xlu0 %2163
      %2165 = vrot.lane.b32.xlu0 %v2141, 8
      %v2166 = vpop.permute.xlu0 %2165
      %2167 = vrot.lane.b32.xlu0 %v2142, 8
      %v2168 = vpop.permute.xlu0 %2167
      %2169 = vrot.lane.b32.xlu0 %v2143, 8
      %v2170 = vpop.permute.xlu0 %2169
      %2171 = vrot.lane.b32.xlu0 %v2144, 8
      %v2172 = vpop.permute.xlu0 %2171
      %2173 = vrot.lane.b32.xlu0 %v2145, 8
      %v2174 = vpop.permute.xlu0 %2173
      %2175 = vrot.lane.b32.xlu0 %v2146, 8
      %v2176 = vpop.permute.xlu0 %2175
      %2177 = vrot.lane.b32.xlu0 %v2147, 8
      %v2178 = vpop.permute.xlu0 %2177
      %2179 = vrot.lane.b32.xlu0 %v2148, 8
      %v2180 = vpop.permute.xlu0 %2179
      %v2181 = vunpack.c.l.b16 %v704
      %v2182 = vunpack.c.l.b16 %v707
      %v2183 = vunpack.c.l.b16 %v711
      %v2184 = vunpack.c.l.b16 %v714
      %v2185 = vunpack.c.l.b16 %v718
      %v2186 = vunpack.c.l.b16 %v721
      %v2187 = vunpack.c.l.b16 %v725
      %v2188 = vunpack.c.l.b16 %v728
      %v2189 = vunpack.c.l.b16 %v732
      %v2190 = vunpack.c.l.b16 %v735
      %v2191 = vunpack.c.l.b16 %v739
      %v2192 = vunpack.c.l.b16 %v742
      %v2193 = vunpack.c.l.b16 %v746
      %v2194 = vunpack.c.l.b16 %v749
      %v2195 = vunpack.c.l.b16 %v753
      %v2196 = vunpack.c.l.b16 %v756
      %v2197 = vunpack.c.l.b16 %v760
      %v2198 = vunpack.c.l.b16 %v763
      %v2199 = vunpack.c.l.b16 %v767
      %v2200 = vunpack.c.l.b16 %v770
      %v2201 = vunpack.c.l.b16 %v774
      %v2202 = vunpack.c.l.b16 %v777
      %v2203 = vunpack.c.l.b16 %v781
      %v2204 = vunpack.c.l.b16 %v784
      %v2205 = vunpack.c.l.b16 %v788
      %v2206 = vunpack.c.l.b16 %v791
      %v2207 = vunpack.c.l.b16 %v795
      %v2208 = vunpack.c.l.b16 %v798
      %v2209 = vunpack.c.l.b16 %v802
      %v2210 = vunpack.c.l.b16 %v805
      %v2211 = vunpack.c.l.b16 %v809
      %v2212 = vunpack.c.l.b16 %v812
      %v2213 = vpack.c.b16 %v2182, %v2181
      %v2214 = vpack.c.b16 %v2184, %v2183
      %v2215 = vpack.c.b16 %v2186, %v2185
      %v2216 = vpack.c.b16 %v2188, %v2187
      %v2217 = vpack.c.b16 %v2190, %v2189
      %v2218 = vpack.c.b16 %v2192, %v2191
      %v2219 = vpack.c.b16 %v2194, %v2193
      %v2220 = vpack.c.b16 %v2196, %v2195
      %v2221 = vpack.c.b16 %v2198, %v2197
      %v2222 = vpack.c.b16 %v2200, %v2199
      %v2223 = vpack.c.b16 %v2202, %v2201
      %v2224 = vpack.c.b16 %v2204, %v2203
      %v2225 = vpack.c.b16 %v2206, %v2205
      %v2226 = vpack.c.b16 %v2208, %v2207
      %v2227 = vpack.c.b16 %v2210, %v2209
      %v2228 = vpack.c.b16 %v2212, %v2211
      %2229 = vrot.lane.b32.xlu0 %v2213, 16
      %v2230 = vpop.permute.xlu0 %2229
      %2231 = vrot.lane.b32.xlu0 %v2214, 16
      %v2232 = vpop.permute.xlu0 %2231
      %2233 = vrot.lane.b32.xlu0 %v2215, 16
      %v2234 = vpop.permute.xlu0 %2233
      %2235 = vrot.lane.b32.xlu0 %v2216, 16
      %v2236 = vpop.permute.xlu0 %2235
      %2237 = vrot.lane.b32.xlu0 %v2217, 16
      %v2238 = vpop.permute.xlu0 %2237
      %2239 = vrot.lane.b32.xlu0 %v2218, 16
      %v2240 = vpop.permute.xlu0 %2239
      %2241 = vrot.lane.b32.xlu0 %v2219, 16
      %v2242 = vpop.permute.xlu0 %2241
      %2243 = vrot.lane.b32.xlu0 %v2220, 16
      %v2244 = vpop.permute.xlu0 %2243
      %2245 = vrot.lane.b32.xlu0 %v2221, 16
      %v2246 = vpop.permute.xlu0 %2245
      %2247 = vrot.lane.b32.xlu0 %v2222, 16
      %v2248 = vpop.permute.xlu0 %2247
      %2249 = vrot.lane.b32.xlu0 %v2223, 16
      %v2250 = vpop.permute.xlu0 %2249
      %2251 = vrot.lane.b32.xlu0 %v2224, 16
      %v2252 = vpop.permute.xlu0 %2251
      %2253 = vrot.lane.b32.xlu0 %v2225, 16
      %v2254 = vpop.permute.xlu0 %2253
      %2255 = vrot.lane.b32.xlu0 %v2226, 16
      %v2256 = vpop.permute.xlu0 %2255
      %2257 = vrot.lane.b32.xlu0 %v2227, 16
      %v2258 = vpop.permute.xlu0 %2257
      %2259 = vrot.lane.b32.xlu0 %v2228, 16
      %v2260 = vpop.permute.xlu0 %2259
      %v2277 = vunpack.c.l.b16 %v817
      %v2278 = vunpack.c.l.b16 %v818
      %v2279 = vunpack.c.l.b16 %v819
      %v2280 = vunpack.c.l.b16 %v820
      %v2281 = vunpack.c.l.b16 %v821
      %v2282 = vunpack.c.l.b16 %v822
      %v2283 = vunpack.c.l.b16 %v823
      %v2284 = vunpack.c.l.b16 %v824
      %v2285 = vunpack.c.l.b16 %v825
      %v2286 = vunpack.c.l.b16 %v826
      %v2287 = vunpack.c.l.b16 %v827
      %v2288 = vunpack.c.l.b16 %v828
      %v2289 = vunpack.c.l.b16 %v829
      %v2290 = vunpack.c.l.b16 %v830
      %v2291 = vunpack.c.l.b16 %v831
      %v2292 = vunpack.c.l.b16 %v832
      %v2293 = vunpack.c.l.b16 %v833
      %v2294 = vunpack.c.l.b16 %v834
      %v2295 = vunpack.c.l.b16 %v835
      %v2296 = vunpack.c.l.b16 %v836
      %v2297 = vunpack.c.l.b16 %v837
      %v2298 = vunpack.c.l.b16 %v838
      %v2299 = vunpack.c.l.b16 %v839
      %v2300 = vunpack.c.l.b16 %v840
      %v2301 = vunpack.c.l.b16 %v841
      %v2302 = vunpack.c.l.b16 %v842
      %v2303 = vunpack.c.l.b16 %v843
      %v2304 = vunpack.c.l.b16 %v844
      %v2305 = vunpack.c.l.b16 %v845
      %v2306 = vunpack.c.l.b16 %v846
      %v2307 = vunpack.c.l.b16 %v847
      %v2308 = vunpack.c.l.b16 %v848
      %v2309 = vpack.c.b16 %v2278, %v2277
      %v2310 = vpack.c.b16 %v2280, %v2279
      %v2311 = vpack.c.b16 %v2282, %v2281
      %v2312 = vpack.c.b16 %v2284, %v2283
      %v2313 = vpack.c.b16 %v2286, %v2285
      %v2314 = vpack.c.b16 %v2288, %v2287
      %v2315 = vpack.c.b16 %v2290, %v2289
      %v2316 = vpack.c.b16 %v2292, %v2291
      %v2317 = vpack.c.b16 %v2294, %v2293
      %v2318 = vpack.c.b16 %v2296, %v2295
      %v2319 = vpack.c.b16 %v2298, %v2297
      %v2320 = vpack.c.b16 %v2300, %v2299
      %v2321 = vpack.c.b16 %v2302, %v2301
      %v2322 = vpack.c.b16 %v2304, %v2303
      %v2323 = vpack.c.b16 %v2306, %v2305
      %v2324 = vpack.c.b16 %v2308, %v2307
      %2325 = vrot.lane.b32.xlu0 %v2309, 24
      %v2326 = vpop.permute.xlu0 %2325
      %2327 = vrot.lane.b32.xlu0 %v2310, 24
      %v2328 = vpop.permute.xlu0 %2327
      %2329 = vrot.lane.b32.xlu0 %v2311, 24
      %v2330 = vpop.permute.xlu0 %2329
      %2331 = vrot.lane.b32.xlu0 %v2312, 24
      %v2332 = vpop.permute.xlu0 %2331
      %2333 = vrot.lane.b32.xlu0 %v2313, 24
      %v2334 = vpop.permute.xlu0 %2333
      %2335 = vrot.lane.b32.xlu0 %v2314, 24
      %v2336 = vpop.permute.xlu0 %2335
      %2337 = vrot.lane.b32.xlu0 %v2315, 24
      %v2338 = vpop.permute.xlu0 %2337
      %2339 = vrot.lane.b32.xlu0 %v2316, 24
      %v2340 = vpop.permute.xlu0 %2339
      %2341 = vrot.lane.b32.xlu0 %v2317, 24
      %v2342 = vpop.permute.xlu0 %2341
      %2343 = vrot.lane.b32.xlu0 %v2318, 24
      %v2344 = vpop.permute.xlu0 %2343
      %2345 = vrot.lane.b32.xlu0 %v2319, 24
      %v2346 = vpop.permute.xlu0 %2345
      %2347 = vrot.lane.b32.xlu0 %v2320, 24
      %v2348 = vpop.permute.xlu0 %2347
      %2349 = vrot.lane.b32.xlu0 %v2321, 24
      %v2350 = vpop.permute.xlu0 %2349
      %2351 = vrot.lane.b32.xlu0 %v2322, 24
      %v2352 = vpop.permute.xlu0 %2351
      %2353 = vrot.lane.b32.xlu0 %v2323, 24
      %v2354 = vpop.permute.xlu0 %2353
      %2355 = vrot.lane.b32.xlu0 %v2324, 24
      %v2356 = vpop.permute.xlu0 %2355
      %v2357 = vunpack.c.l.b16 %v878
      %v2358 = vunpack.c.l.b16 %v888
      %v2359 = vunpack.c.l.b16 %v902
      %v2360 = vunpack.c.l.b16 %v912
      %v2361 = vunpack.c.l.b16 %v926
      %v2362 = vunpack.c.l.b16 %v936
      %v2363 = vunpack.c.l.b16 %v950
      %v2364 = vunpack.c.l.b16 %v960
      %v2365 = vunpack.c.l.b16 %v974
      %v2366 = vunpack.c.l.b16 %v984
      %v2367 = vunpack.c.l.b16 %v998
      %v2368 = vunpack.c.l.b16 %v1008
      %v2369 = vunpack.c.l.b16 %v1022
      %v2370 = vunpack.c.l.b16 %v1032
      %v2371 = vunpack.c.l.b16 %v1046
      %v2372 = vunpack.c.l.b16 %v1056
      %v2373 = vunpack.c.l.b16 %v1070
      %v2374 = vunpack.c.l.b16 %v1080
      %v2375 = vunpack.c.l.b16 %v1094
      %v2376 = vunpack.c.l.b16 %v1104
      %v2377 = vunpack.c.l.b16 %v1118
      %v2378 = vunpack.c.l.b16 %v1128
      %v2379 = vunpack.c.l.b16 %v1142
      %v2380 = vunpack.c.l.b16 %v1152
      %v2381 = vunpack.c.l.b16 %v1166
      %v2382 = vunpack.c.l.b16 %v1176
      %v2383 = vunpack.c.l.b16 %v1190
      %v2384 = vunpack.c.l.b16 %v1200
      %v2385 = vunpack.c.l.b16 %v1214
      %v2386 = vunpack.c.l.b16 %v1224
      %v2387 = vunpack.c.l.b16 %v1238
      %v2388 = vunpack.c.l.b16 %v1248
      %v2389 = vpack.c.b16 %v2358, %v2357
      %v2390 = vpack.c.b16 %v2360, %v2359
      %v2391 = vpack.c.b16 %v2362, %v2361
      %v2392 = vpack.c.b16 %v2364, %v2363
      %v2393 = vpack.c.b16 %v2366, %v2365
      %v2394 = vpack.c.b16 %v2368, %v2367
      %v2395 = vpack.c.b16 %v2370, %v2369
      %v2396 = vpack.c.b16 %v2372, %v2371
      %v2397 = vpack.c.b16 %v2374, %v2373
      %v2398 = vpack.c.b16 %v2376, %v2375
      %v2399 = vpack.c.b16 %v2378, %v2377
      %v2400 = vpack.c.b16 %v2380, %v2379
      %v2401 = vpack.c.b16 %v2382, %v2381
      %v2402 = vpack.c.b16 %v2384, %v2383
      %v2403 = vpack.c.b16 %v2386, %v2385
      %v2404 = vpack.c.b16 %v2388, %v2387
      %2405 = vrot.lane.b32.xlu0 %v2389, 32
      %v2406 = vpop.permute.xlu0 %2405
      %2407 = vrot.lane.b32.xlu0 %v2390, 32
      %v2408 = vpop.permute.xlu0 %2407
      %2409 = vrot.lane.b32.xlu0 %v2391, 32
      %v2410 = vpop.permute.xlu0 %2409
      %2411 = vrot.lane.b32.xlu0 %v2392, 32
      %v2412 = vpop.permute.xlu0 %2411
      %2413 = vrot.lane.b32.xlu0 %v2393, 32
      %v2414 = vpop.permute.xlu0 %2413
      %2415 = vrot.lane.b32.xlu0 %v2394, 32
      %v2416 = vpop.permute.xlu0 %2415
      %2417 = vrot.lane.b32.xlu0 %v2395, 32
      %v2418 = vpop.permute.xlu0 %2417
      %2419 = vrot.lane.b32.xlu0 %v2396, 32
      %v2420 = vpop.permute.xlu0 %2419
      %2421 = vrot.lane.b32.xlu0 %v2397, 32
      %v2422 = vpop.permute.xlu0 %2421
      %2423 = vrot.lane.b32.xlu0 %v2398, 32
      %v2424 = vpop.permute.xlu0 %2423
      %2425 = vrot.lane.b32.xlu0 %v2399, 32
      %v2426 = vpop.permute.xlu0 %2425
      %2427 = vrot.lane.b32.xlu0 %v2400, 32
      %v2428 = vpop.permute.xlu0 %2427
      %2429 = vrot.lane.b32.xlu0 %v2401, 32
      %v2430 = vpop.permute.xlu0 %2429
      %2431 = vrot.lane.b32.xlu0 %v2402, 32
      %v2432 = vpop.permute.xlu0 %2431
      %2433 = vrot.lane.b32.xlu0 %v2403, 32
      %v2434 = vpop.permute.xlu0 %2433
      %2435 = vrot.lane.b32.xlu0 %v2404, 32
      %v2436 = vpop.permute.xlu0 %2435
      %v2437 = vunpack.c.l.b16 %v1316
      %v2438 = vunpack.c.l.b16 %v1319
      %v2439 = vunpack.c.l.b16 %v1323
      %v2440 = vunpack.c.l.b16 %v1326
      %v2441 = vunpack.c.l.b16 %v1330
      %v2442 = vunpack.c.l.b16 %v1333
      %v2443 = vunpack.c.l.b16 %v1337
      %v2444 = vunpack.c.l.b16 %v1340
      %v2445 = vunpack.c.l.b16 %v1344
      %v2446 = vunpack.c.l.b16 %v1347
      %v2447 = vunpack.c.l.b16 %v1351
      %v2448 = vunpack.c.l.b16 %v1354
      %v2449 = vunpack.c.l.b16 %v1358
      %v2450 = vunpack.c.l.b16 %v1361
      %v2451 = vunpack.c.l.b16 %v1365
      %v2452 = vunpack.c.l.b16 %v1368
      %v2453 = vunpack.c.l.b16 %v1372
      %v2454 = vunpack.c.l.b16 %v1375
      %v2455 = vunpack.c.l.b16 %v1379
      %v2456 = vunpack.c.l.b16 %v1382
      %v2457 = vunpack.c.l.b16 %v1386
      %v2458 = vunpack.c.l.b16 %v1389
      %v2459 = vunpack.c.l.b16 %v1393
      %v2460 = vunpack.c.l.b16 %v1396
      %v2461 = vunpack.c.l.b16 %v1400
      %v2462 = vunpack.c.l.b16 %v1403
      %v2463 = vunpack.c.l.b16 %v1407
      %v2464 = vunpack.c.l.b16 %v1410
      %v2465 = vunpack.c.l.b16 %v1414
      %v2466 = vunpack.c.l.b16 %v1417
      %v2467 = vunpack.c.l.b16 %v1421
      %v2468 = vunpack.c.l.b16 %v1424
      %v2469 = vpack.c.b16 %v2438, %v2437
      %v2470 = vpack.c.b16 %v2440, %v2439
      %v2471 = vpack.c.b16 %v2442, %v2441
      %v2472 = vpack.c.b16 %v2444, %v2443
      %v2473 = vpack.c.b16 %v2446, %v2445
      %v2474 = vpack.c.b16 %v2448, %v2447
      %v2475 = vpack.c.b16 %v2450, %v2449
      %v2476 = vpack.c.b16 %v2452, %v2451
      %v2477 = vpack.c.b16 %v2454, %v2453
      %v2478 = vpack.c.b16 %v2456, %v2455
      %v2479 = vpack.c.b16 %v2458, %v2457
      %v2480 = vpack.c.b16 %v2460, %v2459
      %v2481 = vpack.c.b16 %v2462, %v2461
      %v2482 = vpack.c.b16 %v2464, %v2463
      %v2483 = vpack.c.b16 %v2466, %v2465
      %v2484 = vpack.c.b16 %v2468, %v2467
      %2485 = vrot.lane.b32.xlu0 %v2469, 40
      %v2486 = vpop.permute.xlu0 %2485
      %2487 = vrot.lane.b32.xlu0 %v2470, 40
      %v2488 = vpop.permute.xlu0 %2487
      %2489 = vrot.lane.b32.xlu0 %v2471, 40
      %v2490 = vpop.permute.xlu0 %2489
      %2491 = vrot.lane.b32.xlu0 %v2472, 40
      %v2492 = vpop.permute.xlu0 %2491
      %2493 = vrot.lane.b32.xlu0 %v2473, 40
      %v2494 = vpop.permute.xlu0 %2493
      %2495 = vrot.lane.b32.xlu0 %v2474, 40
      %v2496 = vpop.permute.xlu0 %2495
      %2497 = vrot.lane.b32.xlu0 %v2475, 40
      %v2498 = vpop.permute.xlu0 %2497
      %2499 = vrot.lane.b32.xlu0 %v2476, 40
      %v2500 = vpop.permute.xlu0 %2499
      %2501 = vrot.lane.b32.xlu0 %v2477, 40
      %v2502 = vpop.permute.xlu0 %2501
      %2503 = vrot.lane.b32.xlu0 %v2478, 40
      %v2504 = vpop.permute.xlu0 %2503
      %2505 = vrot.lane.b32.xlu0 %v2479, 40
      %v2506 = vpop.permute.xlu0 %2505
      %2507 = vrot.lane.b32.xlu0 %v2480, 40
      %v2508 = vpop.permute.xlu0 %2507
      %2509 = vrot.lane.b32.xlu0 %v2481, 40
      %v2510 = vpop.permute.xlu0 %2509
      %2511 = vrot.lane.b32.xlu0 %v2482, 40
      %v2512 = vpop.permute.xlu0 %2511
      %2513 = vrot.lane.b32.xlu0 %v2483, 40
      %v2514 = vpop.permute.xlu0 %2513
      %2515 = vrot.lane.b32.xlu0 %v2484, 40
      %v2516 = vpop.permute.xlu0 %2515
      %v2533 = vunpack.c.l.b16 %v1429
      %v2534 = vunpack.c.l.b16 %v1430
      %v2535 = vunpack.c.l.b16 %v1431
      %v2536 = vunpack.c.l.b16 %v1432
      %v2537 = vunpack.c.l.b16 %v1433
      %v2538 = vunpack.c.l.b16 %v1434
      %v2539 = vunpack.c.l.b16 %v1435
      %v2540 = vunpack.c.l.b16 %v1436
      %v2541 = vunpack.c.l.b16 %v1437
      %v2542 = vunpack.c.l.b16 %v1438
      %v2543 = vunpack.c.l.b16 %v1439
      %v2544 = vunpack.c.l.b16 %v1440
      %v2545 = vunpack.c.l.b16 %v1441
      %v2546 = vunpack.c.l.b16 %v1442
      %v2547 = vunpack.c.l.b16 %v1443
      %v2548 = vunpack.c.l.b16 %v1444
      %v2549 = vunpack.c.l.b16 %v1445
      %v2550 = vunpack.c.l.b16 %v1446
      %v2551 = vunpack.c.l.b16 %v1447
      %v2552 = vunpack.c.l.b16 %v1448
      %v2553 = vunpack.c.l.b16 %v1449
      %v2554 = vunpack.c.l.b16 %v1450
      %v2555 = vunpack.c.l.b16 %v1451
      %v2556 = vunpack.c.l.b16 %v1452
      %v2557 = vunpack.c.l.b16 %v1453
      %v2558 = vunpack.c.l.b16 %v1454
      %v2559 = vunpack.c.l.b16 %v1455
      %v2560 = vunpack.c.l.b16 %v1456
      %v2561 = vunpack.c.l.b16 %v1457
      %v2562 = vunpack.c.l.b16 %v1458
      %v2563 = vunpack.c.l.b16 %v1459
      %v2564 = vunpack.c.l.b16 %v1460
      %v2565 = vpack.c.b16 %v2534, %v2533
      %v2566 = vpack.c.b16 %v2536, %v2535
      %v2567 = vpack.c.b16 %v2538, %v2537
      %v2568 = vpack.c.b16 %v2540, %v2539
      %v2569 = vpack.c.b16 %v2542, %v2541
      %v2570 = vpack.c.b16 %v2544, %v2543
      %v2571 = vpack.c.b16 %v2546, %v2545
      %v2572 = vpack.c.b16 %v2548, %v2547
      %v2573 = vpack.c.b16 %v2550, %v2549
      %v2574 = vpack.c.b16 %v2552, %v2551
      %v2575 = vpack.c.b16 %v2554, %v2553
      %v2576 = vpack.c.b16 %v2556, %v2555
      %v2577 = vpack.c.b16 %v2558, %v2557
      %v2578 = vpack.c.b16 %v2560, %v2559
      %v2579 = vpack.c.b16 %v2562, %v2561
      %v2580 = vpack.c.b16 %v2564, %v2563
      %2581 = vrot.lane.b32.xlu0 %v2565, 48
      %v2582 = vpop.permute.xlu0 %2581
      %2583 = vrot.lane.b32.xlu0 %v2566, 48
      %v2584 = vpop.permute.xlu0 %2583
      %2585 = vrot.lane.b32.xlu0 %v2567, 48
      %v2586 = vpop.permute.xlu0 %2585
      %2587 = vrot.lane.b32.xlu0 %v2568, 48
      %v2588 = vpop.permute.xlu0 %2587
      %2589 = vrot.lane.b32.xlu0 %v2569, 48
      %v2590 = vpop.permute.xlu0 %2589
      %2591 = vrot.lane.b32.xlu0 %v2570, 48
      %v2592 = vpop.permute.xlu0 %2591
      %2593 = vrot.lane.b32.xlu0 %v2571, 48
      %v2594 = vpop.permute.xlu0 %2593
      %2595 = vrot.lane.b32.xlu0 %v2572, 48
      %v2596 = vpop.permute.xlu0 %2595
      %2597 = vrot.lane.b32.xlu0 %v2573, 48
      %v2598 = vpop.permute.xlu0 %2597
      %2599 = vrot.lane.b32.xlu0 %v2574, 48
      %v2600 = vpop.permute.xlu0 %2599
      %2601 = vrot.lane.b32.xlu0 %v2575, 48
      %v2602 = vpop.permute.xlu0 %2601
      %2603 = vrot.lane.b32.xlu0 %v2576, 48
      %v2604 = vpop.permute.xlu0 %2603
      %2605 = vrot.lane.b32.xlu0 %v2577, 48
      %v2606 = vpop.permute.xlu0 %2605
      %2607 = vrot.lane.b32.xlu0 %v2578, 48
      %v2608 = vpop.permute.xlu0 %2607
      %2609 = vrot.lane.b32.xlu0 %v2579, 48
      %v2610 = vpop.permute.xlu0 %2609
      %2611 = vrot.lane.b32.xlu0 %v2580, 48
      %v2612 = vpop.permute.xlu0 %2611
      %v2613 = vunpack.c.l.b16 %v1490
      %v2614 = vunpack.c.l.b16 %v1500
      %v2615 = vunpack.c.l.b16 %v1514
      %v2616 = vunpack.c.l.b16 %v1524
      %v2617 = vunpack.c.l.b16 %v1538
      %v2618 = vunpack.c.l.b16 %v1548
      %v2619 = vunpack.c.l.b16 %v1562
      %v2620 = vunpack.c.l.b16 %v1572
      %v2621 = vunpack.c.l.b16 %v1586
      %v2622 = vunpack.c.l.b16 %v1596
      %v2623 = vunpack.c.l.b16 %v1610
      %v2624 = vunpack.c.l.b16 %v1620
      %v2625 = vunpack.c.l.b16 %v1634
      %v2626 = vunpack.c.l.b16 %v1644
      %v2627 = vunpack.c.l.b16 %v1658
      %v2628 = vunpack.c.l.b16 %v1668
      %v2629 = vunpack.c.l.b16 %v1682
      %v2630 = vunpack.c.l.b16 %v1692
      %v2631 = vunpack.c.l.b16 %v1706
      %v2632 = vunpack.c.l.b16 %v1716
      %v2633 = vunpack.c.l.b16 %v1730
      %v2634 = vunpack.c.l.b16 %v1740
      %v2635 = vunpack.c.l.b16 %v1754
      %v2636 = vunpack.c.l.b16 %v1764
      %v2637 = vunpack.c.l.b16 %v1778
      %v2638 = vunpack.c.l.b16 %v1788
      %v2639 = vunpack.c.l.b16 %v1802
      %v2640 = vunpack.c.l.b16 %v1812
      %v2641 = vunpack.c.l.b16 %v1826
      %v2642 = vunpack.c.l.b16 %v1836
      %v2643 = vunpack.c.l.b16 %v1850
      %v2644 = vunpack.c.l.b16 %v1860
      %v2645 = vpack.c.b16 %v2614, %v2613
      %v2646 = vpack.c.b16 %v2616, %v2615
      %v2647 = vpack.c.b16 %v2618, %v2617
      %v2648 = vpack.c.b16 %v2620, %v2619
      %v2649 = vpack.c.b16 %v2622, %v2621
      %v2650 = vpack.c.b16 %v2624, %v2623
      %v2651 = vpack.c.b16 %v2626, %v2625
      %v2652 = vpack.c.b16 %v2628, %v2627
      %v2653 = vpack.c.b16 %v2630, %v2629
      %v2654 = vpack.c.b16 %v2632, %v2631
      %v2655 = vpack.c.b16 %v2634, %v2633
      %v2656 = vpack.c.b16 %v2636, %v2635
      %v2657 = vpack.c.b16 %v2638, %v2637
      %v2658 = vpack.c.b16 %v2640, %v2639
      %v2659 = vpack.c.b16 %v2642, %v2641
      %v2660 = vpack.c.b16 %v2644, %v2643
      %2661 = vrot.lane.b32.xlu0 %v2645, 56
      %v2662 = vpop.permute.xlu0 %2661
      %2663 = vrot.lane.b32.xlu0 %v2646, 56
      %v2664 = vpop.permute.xlu0 %2663
      %2665 = vrot.lane.b32.xlu0 %v2647, 56
      %v2666 = vpop.permute.xlu0 %2665
      %2667 = vrot.lane.b32.xlu0 %v2648, 56
      %v2668 = vpop.permute.xlu0 %2667
      %2669 = vrot.lane.b32.xlu0 %v2649, 56
      %v2670 = vpop.permute.xlu0 %2669
      %2671 = vrot.lane.b32.xlu0 %v2650, 56
      %v2672 = vpop.permute.xlu0 %2671
      %2673 = vrot.lane.b32.xlu0 %v2651, 56
      %v2674 = vpop.permute.xlu0 %2673
      %2675 = vrot.lane.b32.xlu0 %v2652, 56
      %v2676 = vpop.permute.xlu0 %2675
      %2677 = vrot.lane.b32.xlu0 %v2653, 56
      %v2678 = vpop.permute.xlu0 %2677
      %2679 = vrot.lane.b32.xlu0 %v2654, 56
      %v2680 = vpop.permute.xlu0 %2679
      %2681 = vrot.lane.b32.xlu0 %v2655, 56
      %v2682 = vpop.permute.xlu0 %2681
      %2683 = vrot.lane.b32.xlu0 %v2656, 56
      %v2684 = vpop.permute.xlu0 %2683
      %2685 = vrot.lane.b32.xlu0 %v2657, 56
      %v2686 = vpop.permute.xlu0 %2685
      %2687 = vrot.lane.b32.xlu0 %v2658, 56
      %v2688 = vpop.permute.xlu0 %2687
      %2689 = vrot.lane.b32.xlu0 %v2659, 56
      %v2690 = vpop.permute.xlu0 %2689
      %2691 = vrot.lane.b32.xlu0 %v2660, 56
      %v2692 = vpop.permute.xlu0 %2691
      %v2693 = vunpack.c.l.b16 %v1928
      %v2694 = vunpack.c.l.b16 %v1931
      %v2695 = vunpack.c.l.b16 %v1935
      %v2696 = vunpack.c.l.b16 %v1938
      %v2697 = vunpack.c.l.b16 %v1942
      %v2698 = vunpack.c.l.b16 %v1945
      %v2699 = vunpack.c.l.b16 %v1949
      %v2700 = vunpack.c.l.b16 %v1952
      %v2701 = vunpack.c.l.b16 %v1956
      %v2702 = vunpack.c.l.b16 %v1959
      %v2703 = vunpack.c.l.b16 %v1963
      %v2704 = vunpack.c.l.b16 %v1966
      %v2705 = vunpack.c.l.b16 %v1970
      %v2706 = vunpack.c.l.b16 %v1973
      %v2707 = vunpack.c.l.b16 %v1977
      %v2708 = vunpack.c.l.b16 %v1980
      %v2709 = vunpack.c.l.b16 %v1984
      %v2710 = vunpack.c.l.b16 %v1987
      %v2711 = vunpack.c.l.b16 %v1991
      %v2712 = vunpack.c.l.b16 %v1994
      %v2713 = vunpack.c.l.b16 %v1998
      %v2714 = vunpack.c.l.b16 %v2001
      %v2715 = vunpack.c.l.b16 %v2005
      %v2716 = vunpack.c.l.b16 %v2008
      %v2717 = vunpack.c.l.b16 %v2012
      %v2718 = vunpack.c.l.b16 %v2015
      %v2719 = vunpack.c.l.b16 %v2019
      %v2720 = vunpack.c.l.b16 %v2022
      %v2721 = vunpack.c.l.b16 %v2026
      %v2722 = vunpack.c.l.b16 %v2029
      %v2723 = vunpack.c.l.b16 %v2033
      %v2724 = vunpack.c.l.b16 %v2036
      %v2725 = vpack.c.b16 %v2694, %v2693
      %v2726 = vpack.c.b16 %v2696, %v2695
      %v2727 = vpack.c.b16 %v2698, %v2697
      %v2728 = vpack.c.b16 %v2700, %v2699
      %v2729 = vpack.c.b16 %v2702, %v2701
      %v2730 = vpack.c.b16 %v2704, %v2703
      %v2731 = vpack.c.b16 %v2706, %v2705
      %v2732 = vpack.c.b16 %v2708, %v2707
      %v2733 = vpack.c.b16 %v2710, %v2709
      %v2734 = vpack.c.b16 %v2712, %v2711
      %v2735 = vpack.c.b16 %v2714, %v2713
      %v2736 = vpack.c.b16 %v2716, %v2715
      %v2737 = vpack.c.b16 %v2718, %v2717
      %v2738 = vpack.c.b16 %v2720, %v2719
      %v2739 = vpack.c.b16 %v2722, %v2721
      %v2740 = vpack.c.b16 %v2724, %v2723
      %2741 = vrot.lane.b32.xlu0 %v2725, 64
      %v2742 = vpop.permute.xlu0 %2741
      %2743 = vrot.lane.b32.xlu0 %v2726, 64
      %v2744 = vpop.permute.xlu0 %2743
      %2745 = vrot.lane.b32.xlu0 %v2727, 64
      %v2746 = vpop.permute.xlu0 %2745
      %2747 = vrot.lane.b32.xlu0 %v2728, 64
      %v2748 = vpop.permute.xlu0 %2747
      %2749 = vrot.lane.b32.xlu0 %v2729, 64
      %v2750 = vpop.permute.xlu0 %2749
      %2751 = vrot.lane.b32.xlu0 %v2730, 64
      %v2752 = vpop.permute.xlu0 %2751
      %2753 = vrot.lane.b32.xlu0 %v2731, 64
      %v2754 = vpop.permute.xlu0 %2753
      %2755 = vrot.lane.b32.xlu0 %v2732, 64
      %v2756 = vpop.permute.xlu0 %2755
      %2757 = vrot.lane.b32.xlu0 %v2733, 64
      %v2758 = vpop.permute.xlu0 %2757
      %2759 = vrot.lane.b32.xlu0 %v2734, 64
      %v2760 = vpop.permute.xlu0 %2759
      %2761 = vrot.lane.b32.xlu0 %v2735, 64
      %v2762 = vpop.permute.xlu0 %2761
      %2763 = vrot.lane.b32.xlu0 %v2736, 64
      %v2764 = vpop.permute.xlu0 %2763
      %2765 = vrot.lane.b32.xlu0 %v2737, 64
      %v2766 = vpop.permute.xlu0 %2765
      %2767 = vrot.lane.b32.xlu0 %v2738, 64
      %v2768 = vpop.permute.xlu0 %2767
      %2769 = vrot.lane.b32.xlu0 %v2739, 64
      %v2770 = vpop.permute.xlu0 %2769
      %2771 = vrot.lane.b32.xlu0 %v2740, 64
      %v2772 = vpop.permute.xlu0 %2771
      %vm2773 = vcmask 64512
      %v2776 = vsel %vm2773, %v2085, %v2150
      %v2779 = vsel %vm2773, %v2086, %v2152
      %v2782 = vsel %vm2773, %v2087, %v2154
      %v2785 = vsel %vm2773, %v2088, %v2156
      %v2788 = vsel %vm2773, %v2089, %v2158
      %v2791 = vsel %vm2773, %v2090, %v2160
      %v2794 = vsel %vm2773, %v2091, %v2162
      %v2797 = vsel %vm2773, %v2092, %v2164
      %v2800 = vsel %vm2773, %v2093, %v2166
      %v2803 = vsel %vm2773, %v2094, %v2168
      %v2806 = vsel %vm2773, %v2095, %v2170
      %v2809 = vsel %vm2773, %v2096, %v2172
      %v2812 = vsel %vm2773, %v2097, %v2174
      %v2815 = vsel %vm2773, %v2098, %v2176
      %v2818 = vsel %vm2773, %v2099, %v2178
      %v2821 = vsel %vm2773, %v2100, %v2180
      %vm2822 = vcmask 130048
      %v2824 = vsel %vm2822, %v2776, %v2230
      %v2826 = vsel %vm2822, %v2779, %v2232
      %v2828 = vsel %vm2822, %v2782, %v2234
      %v2830 = vsel %vm2822, %v2785, %v2236
      %v2832 = vsel %vm2822, %v2788, %v2238
      %v2834 = vsel %vm2822, %v2791, %v2240
      %v2836 = vsel %vm2822, %v2794, %v2242
      %v2838 = vsel %vm2822, %v2797, %v2244
      %v2840 = vsel %vm2822, %v2800, %v2246
      %v2842 = vsel %vm2822, %v2803, %v2248
      %v2844 = vsel %vm2822, %v2806, %v2250
      %v2846 = vsel %vm2822, %v2809, %v2252
      %v2848 = vsel %vm2822, %v2812, %v2254
      %v2850 = vsel %vm2822, %v2815, %v2256
      %v2852 = vsel %vm2822, %v2818, %v2258
      %v2854 = vsel %vm2822, %v2821, %v2260
      %vm2855 = vcmask 195584
      %v2857 = vsel %vm2855, %v2824, %v2326
      %v2859 = vsel %vm2855, %v2826, %v2328
      %v2861 = vsel %vm2855, %v2828, %v2330
      %v2863 = vsel %vm2855, %v2830, %v2332
      %v2865 = vsel %vm2855, %v2832, %v2334
      %v2867 = vsel %vm2855, %v2834, %v2336
      %v2869 = vsel %vm2855, %v2836, %v2338
      %v2871 = vsel %vm2855, %v2838, %v2340
      %v2873 = vsel %vm2855, %v2840, %v2342
      %v2875 = vsel %vm2855, %v2842, %v2344
      %v2877 = vsel %vm2855, %v2844, %v2346
      %v2879 = vsel %vm2855, %v2846, %v2348
      %v2881 = vsel %vm2855, %v2848, %v2350
      %v2883 = vsel %vm2855, %v2850, %v2352
      %v2885 = vsel %vm2855, %v2852, %v2354
      %v2887 = vsel %vm2855, %v2854, %v2356
      %vm2888 = vcmask 261120
      %v2890 = vsel %vm2888, %v2857, %v2406
      %v2892 = vsel %vm2888, %v2859, %v2408
      %v2894 = vsel %vm2888, %v2861, %v2410
      %v2896 = vsel %vm2888, %v2863, %v2412
      %v2898 = vsel %vm2888, %v2865, %v2414
      %v2900 = vsel %vm2888, %v2867, %v2416
      %v2902 = vsel %vm2888, %v2869, %v2418
      %v2904 = vsel %vm2888, %v2871, %v2420
      %v2906 = vsel %vm2888, %v2873, %v2422
      %v2908 = vsel %vm2888, %v2875, %v2424
      %v2910 = vsel %vm2888, %v2877, %v2426
      %v2912 = vsel %vm2888, %v2879, %v2428
      %v2914 = vsel %vm2888, %v2881, %v2430
      %v2916 = vsel %vm2888, %v2883, %v2432
      %v2918 = vsel %vm2888, %v2885, %v2434
      %v2920 = vsel %vm2888, %v2887, %v2436
      %vm2921 = vcmask 326656
      %v2923 = vsel %vm2921, %v2890, %v2486
      %v2925 = vsel %vm2921, %v2892, %v2488
      %v2927 = vsel %vm2921, %v2894, %v2490
      %v2929 = vsel %vm2921, %v2896, %v2492
      %v2931 = vsel %vm2921, %v2898, %v2494
      %v2933 = vsel %vm2921, %v2900, %v2496
      %v2935 = vsel %vm2921, %v2902, %v2498
      %v2937 = vsel %vm2921, %v2904, %v2500
      %v2939 = vsel %vm2921, %v2906, %v2502
      %v2941 = vsel %vm2921, %v2908, %v2504
      %v2943 = vsel %vm2921, %v2910, %v2506
      %v2945 = vsel %vm2921, %v2912, %v2508
      %v2947 = vsel %vm2921, %v2914, %v2510
      %v2949 = vsel %vm2921, %v2916, %v2512
      %v2951 = vsel %vm2921, %v2918, %v2514
      %v2953 = vsel %vm2921, %v2920, %v2516
      %vm2954 = vcmask 392192
      %v2956 = vsel %vm2954, %v2923, %v2582
      %v2958 = vsel %vm2954, %v2925, %v2584
      %v2960 = vsel %vm2954, %v2927, %v2586
      %v2962 = vsel %vm2954, %v2929, %v2588
      %v2964 = vsel %vm2954, %v2931, %v2590
      %v2966 = vsel %vm2954, %v2933, %v2592
      %v2968 = vsel %vm2954, %v2935, %v2594
      %v2970 = vsel %vm2954, %v2937, %v2596
      %v2972 = vsel %vm2954, %v2939, %v2598
      %v2974 = vsel %vm2954, %v2941, %v2600
      %v2976 = vsel %vm2954, %v2943, %v2602
      %v2978 = vsel %vm2954, %v2945, %v2604
      %v2980 = vsel %vm2954, %v2947, %v2606
      %v2982 = vsel %vm2954, %v2949, %v2608
      %v2984 = vsel %vm2954, %v2951, %v2610
      %v2986 = vsel %vm2954, %v2953, %v2612
      %vm2987 = vcmask 457728
      %v2989 = vsel %vm2987, %v2956, %v2662
      %v2991 = vsel %vm2987, %v2958, %v2664
      %v2993 = vsel %vm2987, %v2960, %v2666
      %v2995 = vsel %vm2987, %v2962, %v2668
      %v2997 = vsel %vm2987, %v2964, %v2670
      %v2999 = vsel %vm2987, %v2966, %v2672
      %v3001 = vsel %vm2987, %v2968, %v2674
      %v3003 = vsel %vm2987, %v2970, %v2676
      %v3005 = vsel %vm2987, %v2972, %v2678
      %v3007 = vsel %vm2987, %v2974, %v2680
      %v3009 = vsel %vm2987, %v2976, %v2682
      %v3011 = vsel %vm2987, %v2978, %v2684
      %v3013 = vsel %vm2987, %v2980, %v2686
      %v3015 = vsel %vm2987, %v2982, %v2688
      %v3017 = vsel %vm2987, %v2984, %v2690
      %v3019 = vsel %vm2987, %v2986, %v2692
      %vm3020 = vcmask 523264
      %v3022 = vsel %vm3020, %v2989, %v2742
      %v3024 = vsel %vm3020, %v2991, %v2744
      %v3026 = vsel %vm3020, %v2993, %v2746
      %v3028 = vsel %vm3020, %v2995, %v2748
      %v3030 = vsel %vm3020, %v2997, %v2750
      %v3032 = vsel %vm3020, %v2999, %v2752
      %v3034 = vsel %vm3020, %v3001, %v2754
      %v3036 = vsel %vm3020, %v3003, %v2756
      %v3038 = vsel %vm3020, %v3005, %v2758
      %v3040 = vsel %vm3020, %v3007, %v2760
      %v3042 = vsel %vm3020, %v3009, %v2762
      %v3044 = vsel %vm3020, %v3011, %v2764
      %v3046 = vsel %vm3020, %v3013, %v2766
      %v3048 = vsel %vm3020, %v3015, %v2768
      %v3050 = vsel %vm3020, %v3017, %v2770
      %v3052 = vsel %vm3020, %v3019, %v2772
      %v3053 = vld [vmem:[%s1] sm:$0xf]
      %v3054 = vld [vmem:[%s1 + $0x4] sm:$0xf]
      %v3055 = vld [vmem:[%s1 + $0x8] sm:$0xf]
      %v3056 = vld [vmem:[%s1 + $0xc] sm:$0xf]
      %v3057 = vld [vmem:[%s1 + $0x10] sm:$0xf]
      %v3058 = vld [vmem:[%s1 + $0x14] sm:$0xf]
      %v3059 = vld [vmem:[%s1 + $0x18] sm:$0xf]
      %v3060 = vld [vmem:[%s1 + $0x1c] sm:$0xf]
      %v3061 = vld [vmem:[%s1 + $0x20] sm:$0xf]
      %v3062 = vld [vmem:[%s2] sm:$0x1]
      %v3064 = vperm.slane %v3062, 0
      %v3075 = vunpack.c.l.b16 %v3053
      %v3076 = vunpack.c.l.b16 %v3054
      %v3077 = vunpack.c.l.b16 %v3055
      %v3078 = vunpack.c.l.b16 %v3056
      %v3079 = vunpack.c.l.b16 %v3057
      %v3080 = vunpack.c.l.b16 %v3058
      %v3081 = vunpack.c.l.b16 %v3059
      %v3082 = vunpack.c.l.b16 %v3060
      %v3083 = vunpack.c.l.b16 %v3061
      %v3084 = vpack.c.b16 %v3076, %v3075
      %v3085 = vpack.c.b16 %v3078, %v3077
      %v3086 = vpack.c.b16 %v3080, %v3079
      %v3087 = vpack.c.b16 %v3082, %v3081
      %v3088 = vpack.c.b16 %v3083, %v3083
      %vm3093 = vcmask 588800
      %v3094 = vsel %vm3093, %v3022, 0
      %v3096 = vsel %vm3093, %v3024, 0
      %v3098 = vsel %vm3093, %v3026, 0
      %v3100 = vsel %vm3093, %v3028, 0
      %v3102 = vsel %vm3093, %v3030, 0
      %v3104 = vsel %vm3093, %v3032, 0
      %v3106 = vsel %vm3093, %v3034, 0
      %v3108 = vsel %vm3093, %v3036, 0
      %v3110 = vsel %vm3093, %v3038, 0
      %v3112 = vsel %vm3093, %v3040, 0
      %v3114 = vsel %vm3093, %v3042, 0
      %v3116 = vsel %vm3093, %v3044, 0
      %v3118 = vsel %vm3093, %v3046, 0
      %v3120 = vsel %vm3093, %v3048, 0
      %v3122 = vsel %vm3093, %v3050, 0
      %v3124 = vsel %vm3093, %v3052, 0
      %vm3126 = vcmask 1043456
      %v3128 = vsel %vm3126, %v3088, 0
      %3130 = vmatpush.bf16.msra.mxu0 0
      %3131 = vmatpush.bf16.msra.mxu0 0
      %3132 = vmatpush.bf16.msra.mxu0 0
      %3133 = vmatpush.bf16.msra.mxu0 %v3128
      %3134 = vmatpush.bf16.msra.mxu0 %v3087
      %3135 = vmatpush.bf16.msra.mxu0 %v3086
      %3136 = vmatpush.bf16.msra.mxu0 %v3085
      %3137 = vmatpush.bf16.msra.mxu0 %v3084
      %3138 = vmatmul.bf16.gmra.mxu0 %v3094
      %v3139 = vpop.f32.mrf.mxu0
      %v3140 = vadd.f32 %v3064, %v3139
      %v3141 = vpop.f32.mrf.mxu0
      %v3142 = vadd.f32 %v3064, %v3141
      %3143 = vmatmul.bf16.gmra.mxu0 %v3096
      %v3144 = vpop.f32.mrf.mxu0
      %v3145 = vadd.f32 %v3064, %v3144
      %v3146 = vpop.f32.mrf.mxu0
      %v3147 = vadd.f32 %v3064, %v3146
      %3148 = vmatmul.bf16.gmra.mxu0 %v3098
      %v3149 = vpop.f32.mrf.mxu0
      %v3150 = vadd.f32 %v3064, %v3149
      %v3151 = vpop.f32.mrf.mxu0
      %v3152 = vadd.f32 %v3064, %v3151
      %3153 = vmatmul.bf16.gmra.mxu0 %v3100
      %v3154 = vpop.f32.mrf.mxu0
      %v3155 = vadd.f32 %v3064, %v3154
      %v3156 = vpop.f32.mrf.mxu0
      %v3157 = vadd.f32 %v3064, %v3156
      %3158 = vmatmul.bf16.gmra.mxu0 %v3102
      %v3159 = vpop.f32.mrf.mxu0
      %v3160 = vadd.f32 %v3064, %v3159
      %v3161 = vpop.f32.mrf.mxu0
      %v3162 = vadd.f32 %v3064, %v3161
      %3163 = vmatmul.bf16.gmra.mxu0 %v3104
      %v3164 = vpop.f32.mrf.mxu0
      %v3165 = vadd.f32 %v3064, %v3164
      %v3166 = vpop.f32.mrf.mxu0
      %v3167 = vadd.f32 %v3064, %v3166
      %3168 = vmatmul.bf16.gmra.mxu0 %v3106
      %v3169 = vpop.f32.mrf.mxu0
      %v3170 = vadd.f32 %v3064, %v3169
      %v3171 = vpop.f32.mrf.mxu0
      %v3172 = vadd.f32 %v3064, %v3171
      %3173 = vmatmul.bf16.gmra.mxu0 %v3108
      %v3174 = vpop.f32.mrf.mxu0
      %v3175 = vadd.f32 %v3064, %v3174
      %v3176 = vpop.f32.mrf.mxu0
      %v3177 = vadd.f32 %v3064, %v3176
      %3178 = vmatmul.bf16.gmra.mxu0 %v3110
      %v3179 = vpop.f32.mrf.mxu0
      %v3180 = vadd.f32 %v3064, %v3179
      %v3181 = vpop.f32.mrf.mxu0
      %v3182 = vadd.f32 %v3064, %v3181
      %3183 = vmatmul.bf16.gmra.mxu0 %v3112
      %v3184 = vpop.f32.mrf.mxu0
      %v3185 = vadd.f32 %v3064, %v3184
      %v3186 = vpop.f32.mrf.mxu0
      %v3187 = vadd.f32 %v3064, %v3186
      %3188 = vmatmul.bf16.gmra.mxu0 %v3114
      %v3189 = vpop.f32.mrf.mxu0
      %v3190 = vadd.f32 %v3064, %v3189
      %v3191 = vpop.f32.mrf.mxu0
      %v3192 = vadd.f32 %v3064, %v3191
      %3193 = vmatmul.bf16.gmra.mxu0 %v3116
      %v3194 = vpop.f32.mrf.mxu0
      %v3195 = vadd.f32 %v3064, %v3194
      %v3196 = vpop.f32.mrf.mxu0
      %v3197 = vadd.f32 %v3064, %v3196
      %3198 = vmatmul.bf16.gmra.mxu0 %v3118
      %v3199 = vpop.f32.mrf.mxu0
      %v3200 = vadd.f32 %v3064, %v3199
      %v3201 = vpop.f32.mrf.mxu0
      %v3202 = vadd.f32 %v3064, %v3201
      %3203 = vmatmul.bf16.gmra.mxu0 %v3120
      %v3204 = vpop.f32.mrf.mxu0
      %v3205 = vadd.f32 %v3064, %v3204
      %v3206 = vpop.f32.mrf.mxu0
      %v3207 = vadd.f32 %v3064, %v3206
      %3208 = vmatmul.bf16.gmra.mxu0 %v3122
      %v3209 = vpop.f32.mrf.mxu0
      %v3210 = vadd.f32 %v3064, %v3209
      %v3211 = vpop.f32.mrf.mxu0
      %v3212 = vadd.f32 %v3064, %v3211
      %3213 = vmatmul.bf16.gmra.mxu0 %v3124
      %v3214 = vpop.f32.mrf.mxu0
      %v3215 = vadd.f32 %v3064, %v3214
      %v3216 = vpop.f32.mrf.mxu0
      %v3217 = vadd.f32 %v3064, %v3216
      %3218 = vdwg.mxu0
      %vm3219 = vcmask 97280
      %3220 = vst.msk [vmem:[%s192] sm:$0xff] %vm3219, %v3140
      %3221 = vst.msk [vmem:[%s192 + $0x8] sm:$0xff] %vm3219, %v3142
      %3222 = vst.msk [vmem:[%s192 + $0x10] sm:$0xff] %vm3219, %v3145
      %3223 = vst.msk [vmem:[%s192 + $0x18] sm:$0xff] %vm3219, %v3147
      %3224 = vst.msk [vmem:[%s192 + $0x20] sm:$0xff] %vm3219, %v3150
      %3225 = vst.msk [vmem:[%s192 + $0x28] sm:$0xff] %vm3219, %v3152
      %3226 = vst.msk [vmem:[%s192 + $0x30] sm:$0xff] %vm3219, %v3155
      %3227 = vst.msk [vmem:[%s192 + $0x38] sm:$0xff] %vm3219, %v3157
      %3228 = vst.msk [vmem:[%s192 + $0x40] sm:$0xff] %vm3219, %v3160
      %3229 = vst.msk [vmem:[%s192 + $0x48] sm:$0xff] %vm3219, %v3162
      %3230 = vst.msk [vmem:[%s192 + $0x50] sm:$0xff] %vm3219, %v3165
      %3231 = vst.msk [vmem:[%s192 + $0x58] sm:$0xff] %vm3219, %v3167
      %3232 = vst.msk [vmem:[%s192 + $0x60] sm:$0xff] %vm3219, %v3170
      %3233 = vst.msk [vmem:[%s192 + $0x68] sm:$0xff] %vm3219, %v3172
      %3234 = vst.msk [vmem:[%s192 + $0x70] sm:$0xff] %vm3219, %v3175
      %3235 = vst.msk [vmem:[%s192 + $0x78] sm:$0xff] %vm3219, %v3177
      %3236 = vst.msk [vmem:[%s192 + $0x80] sm:$0xff] %vm3219, %v3180
      %3237 = vst.msk [vmem:[%s192 + $0x88] sm:$0xff] %vm3219, %v3182
      %3238 = vst.msk [vmem:[%s192 + $0x90] sm:$0xff] %vm3219, %v3185
      %3239 = vst.msk [vmem:[%s192 + $0x98] sm:$0xff] %vm3219, %v3187
      %3240 = vst.msk [vmem:[%s192 + $0xa0] sm:$0xff] %vm3219, %v3190
      %3241 = vst.msk [vmem:[%s192 + $0xa8] sm:$0xff] %vm3219, %v3192
      %3242 = vst.msk [vmem:[%s192 + $0xb0] sm:$0xff] %vm3219, %v3195
      %3243 = vst.msk [vmem:[%s192 + $0xb8] sm:$0xff] %vm3219, %v3197
      %3244 = vst.msk [vmem:[%s192 + $0xc0] sm:$0xff] %vm3219, %v3200
      %3245 = vst.msk [vmem:[%s192 + $0xc8] sm:$0xff] %vm3219, %v3202
      %3246 = vst.msk [vmem:[%s192 + $0xd0] sm:$0xff] %vm3219, %v3205
      %3247 = vst.msk [vmem:[%s192 + $0xd8] sm:$0xff] %vm3219, %v3207
      %3248 = vst.msk [vmem:[%s192 + $0xe0] sm:$0xff] %vm3219, %v3210
      %3249 = vst.msk [vmem:[%s192 + $0xe8] sm:$0xff] %vm3219, %v3212
      %3250 = vst.msk [vmem:[%s192 + $0xf0] sm:$0xff] %vm3219, %v3215
      %3251 = vst.msk [vmem:[%s192 + $0xf8] sm:$0xff] %vm3219, %v3217
      %s3252 = smul.u32 32, %s19
      %p3253 = scmp.lt.s32.totalorder %s18, 1
      %s3254 = scalar_select %p3253, %s18, 1
      %p3255 = scmp.lt.s32.totalorder %s3252, 31
      %s3256 = scalar_select %p3255, %s3252, 31
      %s3257 = smul.addr %s3254, 32
      %s3258 = sadd.s32 %s3256, %s3257
      %s3259 = smul.addr %s3258, 8
      %s3260 = scalar_lea.vmem %s3, %s3259
      // Predicated region
      $region33: #{tpu_custom_call.1} parent=31 // pred_check
        %p3261 = pneg %p114
      $region34: #{tpu_custom_call.1} parent=31 // pred_check_branch
        %3263 = sbr.rel (%p3261) target = $region36
      $region35: #{tpu_custom_call.1} parent=31 // pred_region
        %s3264 = smul.u32 32, %s19
      $region36: #{tpu_custom_call.1} parent=31 // pred_fallthru
        _
    $region32: #{tpu_custom_call.1} parent=5 // pred_fallthru
      _
    %p3265 = scmp.le.s32.totalorder 2, %s9
    // Predicated region
    $region37: #{tpu_custom_call.1} parent=5 // pred_check
      %p3266 = pneg %p3265
    $region38: #{tpu_custom_call.1} parent=5 // pred_check_branch
      %3268 = sbr.rel (%p3266) target = $region40
    $region39: #{tpu_custom_call.1} parent=5 // pred_region
      %s3269 = ssub.s32 %s9, 2
      // Predicated region
      $region41: #{tpu_custom_call.1} parent=39 // pred_check
        %p3270 = pneg %p120
      $region42: #{tpu_custom_call.1} parent=39 // pred_check_branch
        %3272 = sbr.rel (%p3270) target = $region44
      $region43: #{tpu_custom_call.1} parent=39 // pred_region
        %s3273 = smul.u32 32, %s21
        %p3274 = scmp.lt.s32.totalorder %s20, 1
        %s3275 = scalar_select %p3274, %s20, 1
        %p3276 = scmp.lt.s32.totalorder %s3273, 31
        %s3277 = scalar_select %p3276, %s3273, 31
        %s3278 = smul.addr %s3275, 32
        %s3279 = sadd.s32 %s3277, %s3278
        %s3280 = smul.addr %s3279, 8
        %s3281 = scalar_lea.vmem %s3, %s3280
      $region44: #{tpu_custom_call.1} parent=39 // pred_fallthru
        _
    $region40: #{tpu_custom_call.1} parent=5 // pred_fallthru
      _
  $region6: #{tpu_custom_call.1} parent=0 // loop_footer
    %s13 = sadd.s32 1, %s9
  $region7: #{tpu_custom_call.1} parent=0 // loop_footer_branch
    %8 = sbr.rel target = $region3
  $region8: #{tpu_custom_call.1} parent=0 // loop_exit
    _

</llo_original>
